<compile_context>
chip_gen: v7x
topology: tpu7x:2x2x1
jax: 0.10.0
libtpu: 0.0.40
codegen_flags: <defaults>
</compile_context>

<pallas_src>
import functools

import jax
import jax.numpy as jnp
from jax.experimental import pallas as pl
from jax.experimental.pallas import tpu as pltpu


_LANE = 128
_VMEM_SPEC = pl.BlockSpec(memory_space=pltpu.MemorySpace.VMEM)


def _pad_to(a, axis, size):
    """Zero-pad `a` along `axis` up to `size` (no-op if already >= size)."""
    pad = size - a.shape[axis]
    if pad <= 0:
        return a
    widths = [(0, 0)] * a.ndim
    widths[axis] = (0, pad)
    return jnp.pad(a, widths)


# ----------------------------------------------------------------------------
# Fused Pallas kernel: conv (im2col matmul) + ReLU + avg-pool + iterative regression
# ----------------------------------------------------------------------------
def _head_kernel(cols_ref, cw_ref, cb_ref, cond_ref,
                 w1f_ref, w1p_ref, b1_ref, w2_ref, b2_ref,
                 feat_ref, params_ref, *, batch, hw, num_stages):
    """
    cols_ref   : (B*HW, K)      im2col columns (K = 9*Cin)
    cw_ref     : (K, Cp)        conv weight, lane-padded
    cb_ref     : (1, Cp)        conv bias,   lane-padded
    cond_ref   : (B, Pp)        starting parameters (param mean / external cond), padded
    w1f_ref    : (Cp, Hp)  w1p_ref : (Pp, Hp)  b1_ref : (1, Hp)
    w2_ref     : (Hp, Pp)  b2_ref  : (1, Pp)
    feat_ref   : (B, Cp)        pooled features (output)
    params_ref : (S, B, Pp)     per-stage cumulative params (output)
    """
    # --- backbone: conv as im2col matmul + bias + ReLU ---
    y = jnp.dot(cols_ref[...], cw_ref[...], preferred_element_type=jnp.float32)
    y = jnp.maximum(y + cb_ref[...], 0.0)                      # (B*HW, Cp)

    # --- global average pooling: one tile-clean reshape + one reduce + one store ---
    cp = y.shape[-1]
    feat = jnp.sum(y.reshape(batch, hw, cp), axis=1) * (1.0 / float(hw))   # (B, Cp)
    feat_ref[...] = feat

    # --- iterative regression: MLP([feat, params]) as split matmul, feat branch hoisted ---
    h_feat = jnp.dot(feat, w1f_ref[...], preferred_element_type=jnp.float32) + b1_ref[...]
    w1p = w1p_ref[...]
    w2 = w2_ref[...]
    b2 = b2_ref[...]
    params = cond_ref[...]
    for s in range(num_stages):        # static unrolled; num_stages is tiny
        h = jnp.maximum(
            h_feat + jnp.dot(params, w1p, preferred_element_type=jnp.float32), 0.0)
        params = params + jnp.dot(h, w2, preferred_element_type=jnp.float32) + b2
        params_ref[s] = params


def head_forward_pallas(cols, conv_w, conv_b, cond, w1f, w1p, b1, w2, b2,
                        *, batch, hw, num_stages):
    m, k = cols.shape
    cp = conv_w.shape[1]
    hp = w1f.shape[1]
    pp = w2.shape[1]

    flops = (2 * m * k * cp + 2 * m * cp + batch * hw * cp       # conv + relu + pool
             + 2 * batch * cp * hp                               # hoisted feat branch
             + num_stages * (2 * batch * pp * hp + 2 * batch * hp * pp + 3 * batch * pp))
    bytes_accessed = 4 * (cols.size + conv_w.size + conv_b.size + cond.size
                          + w1f.size + w1p.size + b1.size + w2.size + b2.size
                          + batch * cp + num_stages * batch * pp)

    kernel = functools.partial(_head_kernel, batch=batch, hw=hw, num_stages=num_stages)
    return pl.pallas_call(
        kernel,
        out_shape=(jax.ShapeDtypeStruct((batch, cp), jnp.float32),
                   jax.ShapeDtypeStruct((num_stages, batch, pp), jnp.float32)),
        in_specs=[_VMEM_SPEC] * 9,
        out_specs=(_VMEM_SPEC, _VMEM_SPEC),
        cost_estimate=pl.CostEstimate(flops=flops, transcendentals=0,
                                      bytes_accessed=bytes_accessed),
    )(cols, conv_w, conv_b, cond, w1f, w1p, b1, w2, b2)


# ----------------------------------------------------------------------------
# Plain-JAX glue: continuous 6D rotation decoder (tiny, per-joint; runs inside jit)
# ----------------------------------------------------------------------------
def cont_rot_repr_decode(x):
    """(B, 6) -> (B, 1, 3, 3) rotation matrices via Gram-Schmidt (expose convention)."""
    bsz = x.shape[0]
    m = x.reshape(-1, 3, 2)
    a1 = m[:, :, 0]
    a2 = m[:, :, 1]
    n1 = jnp.maximum(jnp.linalg.norm(a1, axis=1, keepdims=True), 1e-12)
    b1 = a1 / n1
    dot = jnp.sum(b1 * a2, axis=1, keepdims=True)
    u2 = a2 - dot * b1
    n2 = jnp.maximum(jnp.linalg.norm(u2, axis=1, keepdims=True), 1e-12)
    b2 = u2 / n2
    b3 = jnp.cross(b1, b2, axis=1)
    rot = jnp.stack([b1, b2, b3], axis=-1)  # (B, 3, 3), columns = b1, b2, b3
    return rot.reshape(bsz, -1, 3, 3)


# ----------------------------------------------------------------------------
# HeadPredictor (synthetic weights, deterministic init)
# ----------------------------------------------------------------------------
class HeadPredictorPallas:
    def __init__(self, key,
                 in_channels=3, img_size=16,
                 feat_dim=32, hidden_dim=64,
                 num_betas=10, num_expression_coeffs=10,
                 num_stages=3):
        self.in_channels = in_channels
        self.img_size = img_size
        self.feat_dim = feat_dim
        self.hidden_dim = hidden_dim
        self.num_betas = num_betas
        self.num_expression_coeffs = num_expression_coeffs
        self.num_stages = num_stages

        # parameter layout (cont_rot_repr pose decoders -> dim 6 each, camera dim 3)
        neck_dim, jaw_dim, cam_dim = 6, 6, 3
        self.param_dim = neck_dim + jaw_dim + num_betas + num_expression_coeffs + cam_dim
        s = 0
        self.neck_pose_idxs = (s, s + neck_dim); s += neck_dim
        self.jaw_pose_idxs = (s, s + jaw_dim); s += jaw_dim
        self.shape_idxs = (s, s + num_betas); s += num_betas
        self.expression_idxs = (s, s + num_expression_coeffs); s += num_expression_coeffs
        self.camera_idxs = (s, s + cam_dim); s += cam_dim

        # parameter means (cont_rot_repr: identity = [1,0,0,1,0,0]; neck mean[3] = -1)
        neck_pose_mean = jnp.array([1.0, 0.0, 0.0, -1.0, 0.0, 0.0], jnp.float32)
        jaw_pose_mean = jnp.array([1.0, 0.0, 0.0, 1.0, 0.0, 0.0], jnp.float32)
        shape_mean = jnp.zeros((num_betas,), jnp.float32)
        expression_mean = jnp.zeros((num_expression_coeffs,), jnp.float32)
        camera_mean = jnp.array([0.9, 0.0, 0.0], jnp.float32)
        self.param_mean = jnp.concatenate(
            [neck_pose_mean, jaw_pose_mean, shape_mean, expression_mean, camera_mean]
        ).reshape(1, -1)

        # deterministic synthetic weights (unpadded)
        k0, k1, k2, k3, k4, k5, k6 = jax.random.split(key, 7)
        kcin = 9 * in_channels  # im2col column size, ordering (dy, dx, cin)
        conv_w = 0.05 * jax.random.normal(k0, (kcin, feat_dim), jnp.float32)
        conv_b = 0.05 * jax.random.normal(k1, (1, feat_dim), jnp.float32)
        w1f = 0.05 * jax.random.normal(k2, (feat_dim, hidden_dim), jnp.float32)
        w1p = 0.05 * jax.random.normal(k3, (self.param_dim, hidden_dim), jnp.float32)
        b1 = 0.05 * jax.random.normal(k4, (1, hidden_dim), jnp.float32)
        w2 = 0.05 * jax.random.normal(k5, (hidden_dim, self.param_dim), jnp.float32)
        b2 = 0.05 * jax.random.normal(k6, (1, self.param_dim), jnp.float32)

        # lane-pad everything the kernel touches to 128 (zero pad => exact math)
        self.conv_w_p = _pad_to(conv_w, 1, _LANE)                       # (K, 128)
        self.conv_b_p = _pad_to(conv_b, 1, _LANE)                       # (1, 128)
        self.w1f_p = _pad_to(_pad_to(w1f, 1, _LANE), 0, _LANE)          # (128, 128)
        self.w1p_p = _pad_to(_pad_to(w1p, 1, _LANE), 0, _LANE)          # (128, 128)
        self.b1_p = _pad_to(b1, 1, _LANE)                               # (1, 128)
        self.w2_p = _pad_to(_pad_to(w2, 1, _LANE), 0, _LANE)            # (128, 128)
        self.b2_p = _pad_to(b2, 1, _LANE)                               # (1, 128)

        # one jit over the whole forward (glue + pallas_call + decoders fuse together)
        self._jit_forward = jax.jit(self._forward_impl)

    # helper slicer (torch.index_select over contiguous index ranges)
    @staticmethod
    def _slice(t, idxs):
        return t[:, idxs[0]:idxs[1]]

    def _forward_impl(self, head_imgs, cond):
        batch = head_imgs.shape[0]
        H = W = self.img_size

        # NCHW -> NHWC, pad, im2col; all of this fuses under jit into one XLA fusion.
        x = jnp.transpose(head_imgs, (0, 2, 3, 1)).astype(jnp.float32)   # (B,H,W,C)
        x_pad = jnp.pad(x, ((0, 0), (1, 1), (1, 1), (0, 0)))
        patches = jnp.stack(
            [x_pad[:, dy:dy + H, dx:dx + W, :] for dy in range(3) for dx in range(3)],
            axis=3,
        )                                                                # (B,H,W,9,Cin)
        cols = patches.reshape(batch * H * W, 9 * self.in_channels)

        cond = jnp.broadcast_to(cond.astype(jnp.float32), (batch, self.param_dim))
        cond_p = _pad_to(cond, 1, _LANE)                                 # (B, 128)

        feats_p, params_p = head_forward_pallas(
            cols, self.conv_w_p, self.conv_b_p, cond_p,
            self.w1f_p, self.w1p_p, self.b1_p, self.w2_p, self.b2_p,
            batch=batch, hw=H * W, num_stages=self.num_stages)

        feats = feats_p[:, :self.feat_dim]
        output = {'features': feats}
        for stage in range(self.num_stages):
            p = params_p[stage, :, :self.param_dim]
            neck_pose = self._slice(p, self.neck_pose_idxs)
            jaw_pose = self._slice(p, self.jaw_pose_idxs)
            betas = self._slice(p, self.shape_idxs)
            expression = self._slice(p, self.expression_idxs)
            output[f'stage_{stage:02d}'] = dict(
                head_pose=cont_rot_repr_decode(neck_pose),   # (B,1,3,3)
                raw_jaw_pose=jaw_pose,
                jaw_pose=cont_rot_repr_decode(jaw_pose),     # (B,1,3,3)
                betas=betas,
                expression=expression,
            )
        return output

    def __call__(self, head_imgs, head_mean=None):
        """head_imgs: (B, C, H, W) float32 (PyTorch NCHW convention)."""
        batch = head_imgs.shape[0]
        if batch == 0:
            return {}
        cond = self.param_mean if head_mean is None else head_mean
        output = dict(self._jit_forward(head_imgs, cond))
        output['num_stages'] = self.num_stages
        return output


# ----------------------------------------------------------------------------
if __name__ == "__main__":
    key = jax.random.PRNGKey(0)
    head_imgs = jax.random.normal(key, (2, 3, 16, 16), jnp.float32)

    model = HeadPredictorPallas(jax.random.PRNGKey(42))
    out = model(head_imgs)

    for leaf in jax.tree_util.tree_leaves(out):
        if isinstance(leaf, jax.Array):
            jax.block_until_ready(leaf)

    # light sanity checks
    assert out['features'].shape == (2, model.feat_dim)
    assert out['stage_00']['head_pose'].shape == (2, 1, 3, 3)
    assert out['stage_02']['betas'].shape == (2, model.num_betas)
    print("KERNEL_OK")
</pallas_src>

<mosaic_0001>
module attributes {stable_mosaic.version = 11 : i64} {
  func.func @_head_kernel(%arg0: memref<512x27xf32, #tpu.memory_space<vmem>>, %arg1: memref<27x128xf32, #tpu.memory_space<vmem>>, %arg2: memref<1x128xf32, #tpu.memory_space<vmem>>, %arg3: memref<2x128xf32, #tpu.memory_space<vmem>>, %arg4: memref<128x128xf32, #tpu.memory_space<vmem>>, %arg5: memref<128x128xf32, #tpu.memory_space<vmem>>, %arg6: memref<1x128xf32, #tpu.memory_space<vmem>>, %arg7: memref<128x128xf32, #tpu.memory_space<vmem>>, %arg8: memref<1x128xf32, #tpu.memory_space<vmem>>, %arg9: memref<2x128xf32, #tpu.memory_space<vmem>>, %arg10: memref<3x2x128xf32, #tpu.memory_space<vmem>>) attributes {dimension_semantics = [], scalar_prefetch = 0 : i64, scratch_operands = 0 : i64, tpu.core_type = #tpu.core_type<tc>} {
    %c0 = arith.constant 0 : index
    %c0_0 = arith.constant 0 : index
    %0 = vector.load %arg0[%c0, %c0_0] : memref<512x27xf32, #tpu.memory_space<vmem>>, vector<512x27xf32>
    %c0_1 = arith.constant 0 : index
    %c0_2 = arith.constant 0 : index
    %1 = vector.load %arg1[%c0_1, %c0_2] : memref<27x128xf32, #tpu.memory_space<vmem>>, vector<27x128xf32>
    %cst = arith.constant dense<0.000000e+00> : vector<512x128xf32>
    %2 = tpu.matmul %0, %1, %cst {dimension_numbers = #tpu.dot_dimension_numbers<[1], [0], [0], [1], [0, 0, 1, 1], [], []>} : vector<512x27xf32>, vector<27x128xf32>, vector<512x128xf32> -> vector<512x128xf32>
    %c0_3 = arith.constant 0 : index
    %c0_4 = arith.constant 0 : index
    %3 = vector.load %arg2[%c0_3, %c0_4] : memref<1x128xf32, #tpu.memory_space<vmem>>, vector<1x128xf32>
    %4 = vector.broadcast %3 : vector<1x128xf32> to vector<512x128xf32>
    %5 = arith.addf %2, %4 : vector<512x128xf32>
    %cst_5 = arith.constant 0.000000e+00 : f32
    %6 = vector.broadcast %cst_5 : f32 to vector<512x128xf32>
    %7 = arith.maximumf %5, %6 : vector<512x128xf32>
    %8 = vector.shape_cast %7 : vector<512x128xf32> to vector<2x256x128xf32>
    %cst_6 = arith.constant dense<0.000000e+00> : vector<2x128xf32>
    %9 = vector.multi_reduction <add>, %8, %cst_6 [1] : vector<2x256x128xf32> to vector<2x128xf32>
    %cst_7 = arith.constant 3.906250e-03 : f32
    %10 = vector.broadcast %cst_7 : f32 to vector<2x128xf32>
    %11 = arith.mulf %9, %10 : vector<2x128xf32>
    %c0_8 = arith.constant 0 : index
    %c0_9 = arith.constant 0 : index
    %12 = vector.load %arg9[%c0_8, %c0_9] : memref<2x128xf32, #tpu.memory_space<vmem>>, vector<2x128xf32>
    tpu.vector_store %arg9[%c0_8, %c0_9], %11 {strides = array<i32>} : memref<2x128xf32, #tpu.memory_space<vmem>>, vector<2x128xf32>,
    %c0_10 = arith.constant 0 : index
    %c0_11 = arith.constant 0 : index
    %13 = vector.load %arg4[%c0_10, %c0_11] : memref<128x128xf32, #tpu.memory_space<vmem>>, vector<128x128xf32>
    %cst_12 = arith.constant dense<0.000000e+00> : vector<2x128xf32>
    %14 = tpu.matmul %11, %13, %cst_12 {dimension_numbers = #tpu.dot_dimension_numbers<[1], [0], [0], [1], [0, 0, 1, 1], [], []>} : vector<2x128xf32>, vector<128x128xf32>, vector<2x128xf32> -> vector<2x128xf32>
    %c0_13 = arith.constant 0 : index
    %c0_14 = arith.constant 0 : index
    %15 = vector.load %arg6[%c0_13, %c0_14] : memref<1x128xf32, #tpu.memory_space<vmem>>, vector<1x128xf32>
    %16 = vector.broadcast %15 : vector<1x128xf32> to vector<2x128xf32>
    %17 = arith.addf %14, %16 : vector<2x128xf32>
    %c0_15 = arith.constant 0 : index
    %c0_16 = arith.constant 0 : index
    %18 = vector.load %arg5[%c0_15, %c0_16] : memref<128x128xf32, #tpu.memory_space<vmem>>, vector<128x128xf32>
    %c0_17 = arith.constant 0 : index
    %c0_18 = arith.constant 0 : index
    %19 = vector.load %arg7[%c0_17, %c0_18] : memref<128x128xf32, #tpu.memory_space<vmem>>, vector<128x128xf32>
    %c0_19 = arith.constant 0 : index
    %c0_20 = arith.constant 0 : index
    %20 = vector.load %arg8[%c0_19, %c0_20] : memref<1x128xf32, #tpu.memory_space<vmem>>, vector<1x128xf32>
    %c0_21 = arith.constant 0 : index
    %c0_22 = arith.constant 0 : index
    %21 = vector.load %arg3[%c0_21, %c0_22] : memref<2x128xf32, #tpu.memory_space<vmem>>, vector<2x128xf32>
    %cst_23 = arith.constant dense<0.000000e+00> : vector<2x128xf32>
    %22 = tpu.matmul %21, %18, %cst_23 {dimension_numbers = #tpu.dot_dimension_numbers<[1], [0], [0], [1], [0, 0, 1, 1], [], []>} : vector<2x128xf32>, vector<128x128xf32>, vector<2x128xf32> -> vector<2x128xf32>
    %23 = arith.addf %17, %22 : vector<2x128xf32>
    %cst_24 = arith.constant 0.000000e+00 : f32
    %24 = vector.broadcast %cst_24 : f32 to vector<2x128xf32>
    %25 = arith.maximumf %23, %24 : vector<2x128xf32>
    %cst_25 = arith.constant dense<0.000000e+00> : vector<2x128xf32>
    %26 = tpu.matmul %25, %19, %cst_25 {dimension_numbers = #tpu.dot_dimension_numbers<[1], [0], [0], [1], [0, 0, 1, 1], [], []>} : vector<2x128xf32>, vector<128x128xf32>, vector<2x128xf32> -> vector<2x128xf32>
    %27 = arith.addf %21, %26 : vector<2x128xf32>
    %28 = vector.broadcast %20 : vector<1x128xf32> to vector<2x128xf32>
    %29 = arith.addf %27, %28 : vector<2x128xf32>
    %c0_26 = arith.constant 0 : index
    %c0_27 = arith.constant 0 : index
    %c0_28 = arith.constant 0 : index
    %30 = vector.load %arg10[%c0_26, %c0_27, %c0_28] : memref<3x2x128xf32, #tpu.memory_space<vmem>>, vector<1x2x128xf32>
    %31 = vector.shape_cast %30 : vector<1x2x128xf32> to vector<2x128xf32>
    %32 = vector.shape_cast %29 : vector<2x128xf32> to vector<1x2x128xf32>
    tpu.vector_store %arg10[%c0_26, %c0_27, %c0_28], %32 {strides = array<i32>} : memref<3x2x128xf32, #tpu.memory_space<vmem>>, vector<1x2x128xf32>,
    %cst_29 = arith.constant dense<0.000000e+00> : vector<2x128xf32>
    %33 = tpu.matmul %29, %18, %cst_29 {dimension_numbers = #tpu.dot_dimension_numbers<[1], [0], [0], [1], [0, 0, 1, 1], [], []>} : vector<2x128xf32>, vector<128x128xf32>, vector<2x128xf32> -> vector<2x128xf32>
    %34 = arith.addf %17, %33 : vector<2x128xf32>
    %cst_30 = arith.constant 0.000000e+00 : f32
    %35 = vector.broadcast %cst_30 : f32 to vector<2x128xf32>
    %36 = arith.maximumf %34, %35 : vector<2x128xf32>
    %cst_31 = arith.constant dense<0.000000e+00> : vector<2x128xf32>
    %37 = tpu.matmul %36, %19, %cst_31 {dimension_numbers = #tpu.dot_dimension_numbers<[1], [0], [0], [1], [0, 0, 1, 1], [], []>} : vector<2x128xf32>, vector<128x128xf32>, vector<2x128xf32> -> vector<2x128xf32>
    %38 = arith.addf %29, %37 : vector<2x128xf32>
    %39 = vector.broadcast %20 : vector<1x128xf32> to vector<2x128xf32>
    %40 = arith.addf %38, %39 : vector<2x128xf32>
    %c1 = arith.constant 1 : index
    %c0_32 = arith.constant 0 : index
    %c0_33 = arith.constant 0 : index
    %41 = vector.load %arg10[%c1, %c0_32, %c0_33] : memref<3x2x128xf32, #tpu.memory_space<vmem>>, vector<1x2x128xf32>
    %42 = vector.shape_cast %41 : vector<1x2x128xf32> to vector<2x128xf32>
    %43 = vector.shape_cast %40 : vector<2x128xf32> to vector<1x2x128xf32>
    tpu.vector_store %arg10[%c1, %c0_32, %c0_33], %43 {strides = array<i32>} : memref<3x2x128xf32, #tpu.memory_space<vmem>>, vector<1x2x128xf32>,
    %cst_34 = arith.constant dense<0.000000e+00> : vector<2x128xf32>
    %44 = tpu.matmul %40, %18, %cst_34 {dimension_numbers = #tpu.dot_dimension_numbers<[1], [0], [0], [1], [0, 0, 1, 1], [], []>} : vector<2x128xf32>, vector<128x128xf32>, vector<2x128xf32> -> vector<2x128xf32>
    %45 = arith.addf %17, %44 : vector<2x128xf32>
    %cst_35 = arith.constant 0.000000e+00 : f32
    %46 = vector.broadcast %cst_35 : f32 to vector<2x128xf32>
    %47 = arith.maximumf %45, %46 : vector<2x128xf32>
    %cst_36 = arith.constant dense<0.000000e+00> : vector<2x128xf32>
    %48 = tpu.matmul %47, %19, %cst_36 {dimension_numbers = #tpu.dot_dimension_numbers<[1], [0], [0], [1], [0, 0, 1, 1], [], []>} : vector<2x128xf32>, vector<128x128xf32>, vector<2x128xf32> -> vector<2x128xf32>
    %49 = arith.addf %40, %48 : vector<2x128xf32>
    %50 = vector.broadcast %20 : vector<1x128xf32> to vector<2x128xf32>
    %51 = arith.addf %49, %50 : vector<2x128xf32>
    %c2 = arith.constant 2 : index
    %c0_37 = arith.constant 0 : index
    %c0_38 = arith.constant 0 : index
    %52 = vector.load %arg10[%c2, %c0_37, %c0_38] : memref<3x2x128xf32, #tpu.memory_space<vmem>>, vector<1x2x128xf32>
    %53 = vector.shape_cast %52 : vector<1x2x128xf32> to vector<2x128xf32>
    %54 = vector.shape_cast %51 : vector<2x128xf32> to vector<1x2x128xf32>
    tpu.vector_store %arg10[%c2, %c0_37, %c0_38], %54 {strides = array<i32>} : memref<3x2x128xf32, #tpu.memory_space<vmem>>, vector<1x2x128xf32>,
    return
  }
}

</mosaic_0001>

<llo_original>
// kernel: _forward_impl.1
$region0: #{_forward_impl.1}
  #allocation0 [shape = 'u32[]', space=smem, size = 0x4, offset = 0x4, fixed_abs, tag = 'smem constant byte address 0x4 - core index']
  #allocation1 [shape = 'u32[144,128]{1,0:T(1,128)}', space=vmem, size = 0x12000, scoped, tag = 'internal scratch']
  %s0 = inlined_call_operand.vmem [shape: f32[512,27], index: 0, kind: input, shape index: {}]
  %s1 = inlined_call_operand.vmem [shape: f32[27,128], index: 1, kind: input, shape index: {}]
  %s2 = inlined_call_operand.vmem [shape: f32[1,128], index: 2, kind: input, shape index: {}]
  %s3 = inlined_call_operand.vmem [shape: f32[2,128], index: 3, kind: input, shape index: {}]
  %s4 = inlined_call_operand.vmem [shape: f32[128,128], index: 4, kind: input, shape index: {}]
  %s5 = inlined_call_operand.vmem [shape: f32[128,128], index: 5, kind: input, shape index: {}]
  %s6 = inlined_call_operand.vmem [shape: f32[1,128], index: 6, kind: input, shape index: {}]
  %s7 = inlined_call_operand.vmem [shape: f32[128,128], index: 7, kind: input, shape index: {}]
  %s8 = inlined_call_operand.vmem [shape: f32[1,128], index: 8, kind: input, shape index: {}]
  %s9 = inlined_call_operand.hbm [shape: f32[2,128], index: 9, kind: output, shape index: {0}]
  %s10 = inlined_call_operand.vmem [shape: f32[3,2,128], index: 10, kind: output, shape index: {1}]
  %11 = xla_tuple %s9, %s10
  %s12 = sld [smem:[#allocation0]]
  $region54: #{_forward_impl.1} parent=0
    _
  %s14 = ssub.s32 1, %s12
  %s15 = scalar_select 0, %s14, %s12
  $region1: #{_forward_impl.1} parent=0
    #allocation2 [shape = 'u8[1024]{0}', space=vmem, size = 0x400, scoped, tag = 'output window, operand 0, single buffered']
    #allocation3 [shape = 's32[1]{0}', space=sflag, size = 0x4, scoped, tag = 'scoped memory for _forward_impl.1']
    %16 = vsyncpa [#allocation3], 0
    // Predicated region
    $region2: #{_forward_impl.1} parent=1 // pred_check
      _
    $region3: #{_forward_impl.1} parent=1 // pred_check_branch
      %18 = sbr.rel (0) target = $region5
    $region4: #{_forward_impl.1} parent=1 // pred_region
      _
    $region5: #{_forward_impl.1} parent=1 // pred_fallthru
      _
    // Predicated region
    $region6: #{_forward_impl.1} parent=1 // pred_check
      _
    $region7: #{_forward_impl.1} parent=1 // pred_check_branch
      %20 = sbr.rel (0) target = $region9
    $region8: #{_forward_impl.1} parent=1 // pred_region
      _
    $region9: #{_forward_impl.1} parent=1 // pred_fallthru
      _
    // Predicated region
    $region10: #{_forward_impl.1} parent=1 // pred_check
      _
    $region11: #{_forward_impl.1} parent=1 // pred_check_branch
      %22 = sbr.rel (0) target = $region13
    $region12: #{_forward_impl.1} parent=1 // pred_region
      _
    $region13: #{_forward_impl.1} parent=1 // pred_fallthru
      _
    // Predicated region
    $region14: #{_forward_impl.1} parent=1 // pred_check
      _
    $region15: #{_forward_impl.1} parent=1 // pred_check_branch
      %24 = sbr.rel (0) target = $region17
    $region16: #{_forward_impl.1} parent=1 // pred_region
      _
    $region17: #{_forward_impl.1} parent=1 // pred_fallthru
      _
    // Predicated region
    $region18: #{_forward_impl.1} parent=1 // pred_check
      _
    $region19: #{_forward_impl.1} parent=1 // pred_check_branch
      %26 = sbr.rel (0) target = $region21
    $region20: #{_forward_impl.1} parent=1 // pred_region
      _
    $region21: #{_forward_impl.1} parent=1 // pred_fallthru
      _
    // Predicated region
    $region22: #{_forward_impl.1} parent=1 // pred_check
      _
    $region23: #{_forward_impl.1} parent=1 // pred_check_branch
      %28 = sbr.rel (0) target = $region25
    $region24: #{_forward_impl.1} parent=1 // pred_region
      _
    $region25: #{_forward_impl.1} parent=1 // pred_fallthru
      _
    // Predicated region
    $region26: #{_forward_impl.1} parent=1 // pred_check
      _
    $region27: #{_forward_impl.1} parent=1 // pred_check_branch
      %30 = sbr.rel (0) target = $region29
    $region28: #{_forward_impl.1} parent=1 // pred_region
      _
    $region29: #{_forward_impl.1} parent=1 // pred_fallthru
      _
    // Predicated region
    $region30: #{_forward_impl.1} parent=1 // pred_check
      _
    $region31: #{_forward_impl.1} parent=1 // pred_check_branch
      %32 = sbr.rel (0) target = $region33
    $region32: #{_forward_impl.1} parent=1 // pred_region
      _
    $region33: #{_forward_impl.1} parent=1 // pred_fallthru
      _
    // Predicated region
    $region34: #{_forward_impl.1} parent=1 // pred_check
      _
    $region35: #{_forward_impl.1} parent=1 // pred_check_branch
      %34 = sbr.rel (0) target = $region37
    $region36: #{_forward_impl.1} parent=1 // pred_region
      _
    $region37: #{_forward_impl.1} parent=1 // pred_fallthru
      _
    %v35 = vld [vmem:[%s0] sm:$0xff]
    %v36 = vld [vmem:[%s0 + $0x8] sm:$0xff]
    %v37 = vld [vmem:[%s0 + $0x10] sm:$0xff]
    %v38 = vld [vmem:[%s0 + $0x18] sm:$0xff]
    %v39 = vld [vmem:[%s0 + $0x20] sm:$0xff]
    %v40 = vld [vmem:[%s0 + $0x28] sm:$0xff]
    %v41 = vld [vmem:[%s0 + $0x30] sm:$0xff]
    %v42 = vld [vmem:[%s0 + $0x38] sm:$0xff]
    %v43 = vld [vmem:[%s0 + $0x40] sm:$0xff]
    %v44 = vld [vmem:[%s0 + $0x48] sm:$0xff]
    %v45 = vld [vmem:[%s0 + $0x50] sm:$0xff]
    %v46 = vld [vmem:[%s0 + $0x58] sm:$0xff]
    %v47 = vld [vmem:[%s0 + $0x60] sm:$0xff]
    %v48 = vld [vmem:[%s0 + $0x68] sm:$0xff]
    %v49 = vld [vmem:[%s0 + $0x70] sm:$0xff]
    %v50 = vld [vmem:[%s0 + $0x78] sm:$0xff]
    %v51 = vld [vmem:[%s0 + $0x80] sm:$0xff]
    %v52 = vld [vmem:[%s0 + $0x88] sm:$0xff]
    %v53 = vld [vmem:[%s0 + $0x90] sm:$0xff]
    %v54 = vld [vmem:[%s0 + $0x98] sm:$0xff]
    %v55 = vld [vmem:[%s0 + $0xa0] sm:$0xff]
    %v56 = vld [vmem:[%s0 + $0xa8] sm:$0xff]
    %v57 = vld [vmem:[%s0 + $0xb0] sm:$0xff]
    %v58 = vld [vmem:[%s0 + $0xb8] sm:$0xff]
    %v59 = vld [vmem:[%s0 + $0xc0] sm:$0xff]
    %v60 = vld [vmem:[%s0 + $0xc8] sm:$0xff]
    %v61 = vld [vmem:[%s0 + $0xd0] sm:$0xff]
    %v62 = vld [vmem:[%s0 + $0xd8] sm:$0xff]
    %v63 = vld [vmem:[%s0 + $0xe0] sm:$0xff]
    %v64 = vld [vmem:[%s0 + $0xe8] sm:$0xff]
    %v65 = vld [vmem:[%s0 + $0xf0] sm:$0xff]
    %v66 = vld [vmem:[%s0 + $0xf8] sm:$0xff]
    %v67 = vld [vmem:[%s0 + $0x100] sm:$0xff]
    %v68 = vld [vmem:[%s0 + $0x108] sm:$0xff]
    %v69 = vld [vmem:[%s0 + $0x110] sm:$0xff]
    %v70 = vld [vmem:[%s0 + $0x118] sm:$0xff]
    %v71 = vld [vmem:[%s0 + $0x120] sm:$0xff]
    %v72 = vld [vmem:[%s0 + $0x128] sm:$0xff]
    %v73 = vld [vmem:[%s0 + $0x130] sm:$0xff]
    %v74 = vld [vmem:[%s0 + $0x138] sm:$0xff]
    %v75 = vld [vmem:[%s0 + $0x140] sm:$0xff]
    %v76 = vld [vmem:[%s0 + $0x148] sm:$0xff]
    %v77 = vld [vmem:[%s0 + $0x150] sm:$0xff]
    %v78 = vld [vmem:[%s0 + $0x158] sm:$0xff]
    %v79 = vld [vmem:[%s0 + $0x160] sm:$0xff]
    %v80 = vld [vmem:[%s0 + $0x168] sm:$0xff]
    %v81 = vld [vmem:[%s0 + $0x170] sm:$0xff]
    %v82 = vld [vmem:[%s0 + $0x178] sm:$0xff]
    %v83 = vld [vmem:[%s0 + $0x180] sm:$0xff]
    %v84 = vld [vmem:[%s0 + $0x188] sm:$0xff]
    %v85 = vld [vmem:[%s0 + $0x190] sm:$0xff]
    %v86 = vld [vmem:[%s0 + $0x198] sm:$0xff]
    %v87 = vld [vmem:[%s0 + $0x1a0] sm:$0xff]
    %v88 = vld [vmem:[%s0 + $0x1a8] sm:$0xff]
    %v89 = vld [vmem:[%s0 + $0x1b0] sm:$0xff]
    %v90 = vld [vmem:[%s0 + $0x1b8] sm:$0xff]
    %v91 = vld [vmem:[%s0 + $0x1c0] sm:$0xff]
    %v92 = vld [vmem:[%s0 + $0x1c8] sm:$0xff]
    %v93 = vld [vmem:[%s0 + $0x1d0] sm:$0xff]
    %v94 = vld [vmem:[%s0 + $0x1d8] sm:$0xff]
    %v95 = vld [vmem:[%s0 + $0x1e0] sm:$0xff]
    %v96 = vld [vmem:[%s0 + $0x1e8] sm:$0xff]
    %v97 = vld [vmem:[%s0 + $0x1f0] sm:$0xff]
    %v98 = vld [vmem:[%s0 + $0x1f8] sm:$0xff]
    %v99 = vld [vmem:[%s1] sm:$0xff]
    %v100 = vld [vmem:[%s1 + $0x8] sm:$0xff]
    %v101 = vld [vmem:[%s1 + $0x10] sm:$0xff]
    %v102 = vld [vmem:[%s1 + $0x18] sm:$0x7]
    %v103 = vld [vmem:[%s2] sm:$0x1]
    %v105 = vlaneseq
    %v106 = vshrl.u32 %v105, 7
    %v107 = vsub.s32 0, %v106
    %v108 = vrot.slane %v103, %v107
    %vm110 = vcmask 220160
    %v112 = vsel %vm110, %v35, 0
    %v115 = vsel %vm110, %v36, 0
    %v118 = vsel %vm110, %v37, 0
    %v121 = vsel %vm110, %v38, 0
    %v124 = vsel %vm110, %v39, 0
    %v127 = vsel %vm110, %v40, 0
    %v130 = vsel %vm110, %v41, 0
    %v133 = vsel %vm110, %v42, 0
    %v136 = vsel %vm110, %v43, 0
    %v139 = vsel %vm110, %v44, 0
    %v142 = vsel %vm110, %v45, 0
    %v145 = vsel %vm110, %v46, 0
    %v148 = vsel %vm110, %v47, 0
    %v151 = vsel %vm110, %v48, 0
    %v154 = vsel %vm110, %v49, 0
    %v157 = vsel %vm110, %v50, 0
    %v160 = vsel %vm110, %v51, 0
    %v163 = vsel %vm110, %v52, 0
    %v166 = vsel %vm110, %v53, 0
    %v169 = vsel %vm110, %v54, 0
    %v172 = vsel %vm110, %v55, 0
    %v175 = vsel %vm110, %v56, 0
    %v178 = vsel %vm110, %v57, 0
    %v181 = vsel %vm110, %v58, 0
    %v184 = vsel %vm110, %v59, 0
    %v187 = vsel %vm110, %v60, 0
    %v190 = vsel %vm110, %v61, 0
    %v193 = vsel %vm110, %v62, 0
    %v196 = vsel %vm110, %v63, 0
    %v199 = vsel %vm110, %v64, 0
    %v202 = vsel %vm110, %v65, 0
    %v205 = vsel %vm110, %v66, 0
    %v208 = vsel %vm110, %v67, 0
    %v211 = vsel %vm110, %v68, 0
    %v214 = vsel %vm110, %v69, 0
    %v217 = vsel %vm110, %v70, 0
    %v220 = vsel %vm110, %v71, 0
    %v223 = vsel %vm110, %v72, 0
    %v226 = vsel %vm110, %v73, 0
    %v229 = vsel %vm110, %v74, 0
    %v232 = vsel %vm110, %v75, 0
    %v235 = vsel %vm110, %v76, 0
    %v238 = vsel %vm110, %v77, 0
    %v241 = vsel %vm110, %v78, 0
    %v244 = vsel %vm110, %v79, 0
    %v247 = vsel %vm110, %v80, 0
    %v250 = vsel %vm110, %v81, 0
    %v253 = vsel %vm110, %v82, 0
    %v256 = vsel %vm110, %v83, 0
    %v259 = vsel %vm110, %v84, 0
    %v262 = vsel %vm110, %v85, 0
    %v265 = vsel %vm110, %v86, 0
    %v268 = vsel %vm110, %v87, 0
    %v271 = vsel %vm110, %v88, 0
    %v274 = vsel %vm110, %v89, 0
    %v277 = vsel %vm110, %v90, 0
    %v280 = vsel %vm110, %v91, 0
    %v283 = vsel %vm110, %v92, 0
    %v286 = vsel %vm110, %v93, 0
    %v289 = vsel %vm110, %v94, 0
    %v292 = vsel %vm110, %v95, 0
    %v295 = vsel %vm110, %v96, 0
    %v298 = vsel %vm110, %v97, 0
    %v301 = vsel %vm110, %v98, 0
    %vm303 = vcmask 1042432
    %v305 = vsel %vm303, %v102, 0
    %307 = vmatprep.subr.mxu0 0.0
    %308 = vmatpush1.msra.mxu0 %v99
    %309 = vmatprep.subr.mxu0 0.0
    %310 = vmatpush1.msra.mxu0 %v100
    %311 = vmatprep.subr.mxu0 0.0
    %312 = vmatpush1.msra.mxu0 %v101
    %313 = vmatprep.subr.mxu0 0.0
    %314 = vmatpush1.msra.mxu0 %v305
    %315 = vmatprep.subr.mxu0 0.0
    %316 = vmatpush1.msra.mxu0 0.0
    %317 = vmatprep.subr.mxu0 0.0
    %318 = vmatpush1.msra.mxu0 0.0
    %319 = vmatprep.subr.mxu0 0.0
    %320 = vmatpush1.msra.mxu0 0.0
    %321 = vmatprep.subr.mxu0 0.0
    %322 = vmatpush1.msra.mxu0 0.0
    %323 = vmatprep.subr.mxu0 0.0
    %324 = vmatpush1.msra.mxu0 0.0
    %325 = vmatprep.subr.mxu0 0.0
    %326 = vmatpush1.msra.mxu0 0.0
    %327 = vmatprep.subr.mxu0 0.0
    %328 = vmatpush1.msra.mxu0 0.0
    %329 = vmatprep.subr.mxu0 0.0
    %330 = vmatpush1.msra.mxu0 0.0
    %331 = vmatprep.subr.mxu0 0.0
    %332 = vmatpush1.msra.mxu0 0.0
    %333 = vmatprep.subr.mxu0 0.0
    %334 = vmatpush1.msra.mxu0 0.0
    %335 = vmatprep.subr.mxu0 0.0
    %336 = vmatpush1.msra.mxu0 0.0
    %337 = vmatprep.subr.mxu0 0.0
    %338 = vmatpush1.msra.mxu0 0.0
    %339 = vmatprep.subr.mxu0 0.0
    %340 = vmatpush1.msra.mxu0 0.0
    %341 = vmatprep.subr.mxu0 0.0
    %342 = vmatpush1.msra.mxu0 0.0
    %343 = vmatprep.subr.mxu0 0.0
    %344 = vmatpush1.msra.mxu0 0.0
    %345 = vmatprep.subr.mxu0 0.0
    %346 = vmatpush1.msra.mxu0 0.0
    %347 = vmatprep.subr.mxu0 0.0
    %348 = vmatpush1.msra.mxu0 0.0
    %349 = vmatprep.subr.mxu0 0.0
    %350 = vmatpush1.msra.mxu0 0.0
    %351 = vmatprep.subr.mxu0 0.0
    %352 = vmatpush1.msra.mxu0 0.0
    %353 = vmatprep.subr.mxu0 0.0
    %354 = vmatpush1.msra.mxu0 0.0
    %355 = vmatprep.subr.mxu0 0.0
    %356 = vmatpush1.msra.mxu0 0.0
    %357 = vmatprep.subr.mxu0 0.0
    %358 = vmatpush1.msra.mxu0 0.0
    %359 = vmatprep.subr.mxu0 0.0
    %360 = vmatpush1.msra.mxu0 0.0
    %361 = vmatprep.subr.mxu0 0.0
    %362 = vmatpush1.msra.mxu0 0.0
    %363 = vmatprep.subr.mxu0 0.0
    %364 = vmatpush1.msra.mxu0 0.0
    %365 = vmatprep.subr.mxu0 0.0
    %366 = vmatpush1.msra.mxu0 0.0
    %367 = vmatprep.subr.mxu0 0.0
    %368 = vmatpush1.msra.mxu0 0.0
    %369 = vmatprep.subr.mxu0 0.0
    %370 = vmatpush1.msra.mxu0 0.0
    %371 = vmatprep.mubr.f32.mxu0 0.0
    %372 = vmatmul.mubr.f32.gmra.mrb[0].mxu0 %v112
    %v373 = vpop.f32.mrb[0].mxu0
    %v374 = vadd.f32 %v108, %v373
    %v375 = vpop.f32.mrb[0].mxu0
    %376 = vmatprep.mubr.f32.mxu0 0.0
    %377 = vmatmul.mubr.f32.gmra.mrb[0].mxu0 %v115
    %v378 = vpop.f32.mrb[0].mxu0
    %v379 = vadd.f32 %v108, %v378
    %v380 = vpop.f32.mrb[0].mxu0
    %381 = vmatprep.mubr.f32.mxu0 0.0
    %382 = vmatmul.mubr.f32.gmra.mrb[0].mxu0 %v118
    %v383 = vpop.f32.mrb[0].mxu0
    %v384 = vadd.f32 %v108, %v383
    %v385 = vpop.f32.mrb[0].mxu0
    %386 = vmatprep.mubr.f32.mxu0 0.0
    %387 = vmatmul.mubr.f32.gmra.mrb[0].mxu0 %v121
    %v388 = vpop.f32.mrb[0].mxu0
    %v389 = vadd.f32 %v108, %v388
    %v390 = vpop.f32.mrb[0].mxu0
    %391 = vmatprep.mubr.f32.mxu0 0.0
    %392 = vmatmul.mubr.f32.gmra.mrb[0].mxu0 %v124
    %v393 = vpop.f32.mrb[0].mxu0
    %v394 = vadd.f32 %v108, %v393
    %v395 = vpop.f32.mrb[0].mxu0
    %396 = vmatprep.mubr.f32.mxu0 0.0
    %397 = vmatmul.mubr.f32.gmra.mrb[0].mxu0 %v127
    %v398 = vpop.f32.mrb[0].mxu0
    %v399 = vadd.f32 %v108, %v398
    %v400 = vpop.f32.mrb[0].mxu0
    %401 = vmatprep.mubr.f32.mxu0 0.0
    %402 = vmatmul.mubr.f32.gmra.mrb[0].mxu0 %v130
    %v403 = vpop.f32.mrb[0].mxu0
    %v404 = vadd.f32 %v108, %v403
    %v405 = vpop.f32.mrb[0].mxu0
    %406 = vmatprep.mubr.f32.mxu0 0.0
    %407 = vmatmul.mubr.f32.gmra.mrb[0].mxu0 %v133
    %v408 = vpop.f32.mrb[0].mxu0
    %v409 = vadd.f32 %v108, %v408
    %v410 = vpop.f32.mrb[0].mxu0
    %411 = vmatprep.mubr.f32.mxu0 0.0
    %412 = vmatmul.mubr.f32.gmra.mrb[0].mxu0 %v136
    %v413 = vpop.f32.mrb[0].mxu0
    %v414 = vadd.f32 %v108, %v413
    %v415 = vpop.f32.mrb[0].mxu0
    %416 = vmatprep.mubr.f32.mxu0 0.0
    %417 = vmatmul.mubr.f32.gmra.mrb[0].mxu0 %v139
    %v418 = vpop.f32.mrb[0].mxu0
    %v419 = vadd.f32 %v108, %v418
    %v420 = vpop.f32.mrb[0].mxu0
    %421 = vmatprep.mubr.f32.mxu0 0.0
    %422 = vmatmul.mubr.f32.gmra.mrb[0].mxu0 %v142
    %v423 = vpop.f32.mrb[0].mxu0
    %v424 = vadd.f32 %v108, %v423
    %v425 = vpop.f32.mrb[0].mxu0
    %426 = vmatprep.mubr.f32.mxu0 0.0
    %427 = vmatmul.mubr.f32.gmra.mrb[0].mxu0 %v145
    %v428 = vpop.f32.mrb[0].mxu0
    %v429 = vadd.f32 %v108, %v428
    %v430 = vpop.f32.mrb[0].mxu0
    %431 = vmatprep.mubr.f32.mxu0 0.0
    %432 = vmatmul.mubr.f32.gmra.mrb[0].mxu0 %v148
    %v433 = vpop.f32.mrb[0].mxu0
    %v434 = vadd.f32 %v108, %v433
    %v435 = vpop.f32.mrb[0].mxu0
    %436 = vmatprep.mubr.f32.mxu0 0.0
    %437 = vmatmul.mubr.f32.gmra.mrb[0].mxu0 %v151
    %v438 = vpop.f32.mrb[0].mxu0
    %v439 = vadd.f32 %v108, %v438
    %v440 = vpop.f32.mrb[0].mxu0
    %441 = vmatprep.mubr.f32.mxu0 0.0
    %442 = vmatmul.mubr.f32.gmra.mrb[0].mxu0 %v154
    %v443 = vpop.f32.mrb[0].mxu0
    %v444 = vadd.f32 %v108, %v443
    %v445 = vpop.f32.mrb[0].mxu0
    %446 = vmatprep.mubr.f32.mxu0 0.0
    %447 = vmatmul.mubr.f32.gmra.mrb[0].mxu0 %v157
    %v448 = vpop.f32.mrb[0].mxu0
    %v449 = vadd.f32 %v108, %v448
    %v450 = vpop.f32.mrb[0].mxu0
    %451 = vmatprep.mubr.f32.mxu0 0.0
    %452 = vmatmul.mubr.f32.gmra.mrb[0].mxu0 %v160
    %v453 = vpop.f32.mrb[0].mxu0
    %v454 = vadd.f32 %v108, %v453
    %v455 = vpop.f32.mrb[0].mxu0
    %456 = vmatprep.mubr.f32.mxu0 0.0
    %457 = vmatmul.mubr.f32.gmra.mrb[0].mxu0 %v163
    %v458 = vpop.f32.mrb[0].mxu0
    %v459 = vadd.f32 %v108, %v458
    %v460 = vpop.f32.mrb[0].mxu0
    %461 = vmatprep.mubr.f32.mxu0 0.0
    %462 = vmatmul.mubr.f32.gmra.mrb[0].mxu0 %v166
    %v463 = vpop.f32.mrb[0].mxu0
    %v464 = vadd.f32 %v108, %v463
    %v465 = vpop.f32.mrb[0].mxu0
    %466 = vmatprep.mubr.f32.mxu0 0.0
    %467 = vmatmul.mubr.f32.gmra.mrb[0].mxu0 %v169
    %v468 = vpop.f32.mrb[0].mxu0
    %v469 = vadd.f32 %v108, %v468
    %v470 = vpop.f32.mrb[0].mxu0
    %471 = vmatprep.mubr.f32.mxu0 0.0
    %472 = vmatmul.mubr.f32.gmra.mrb[0].mxu0 %v172
    %v473 = vpop.f32.mrb[0].mxu0
    %v474 = vadd.f32 %v108, %v473
    %v475 = vpop.f32.mrb[0].mxu0
    %476 = vmatprep.mubr.f32.mxu0 0.0
    %477 = vmatmul.mubr.f32.gmra.mrb[0].mxu0 %v175
    %v478 = vpop.f32.mrb[0].mxu0
    %v479 = vadd.f32 %v108, %v478
    %v480 = vpop.f32.mrb[0].mxu0
    %481 = vmatprep.mubr.f32.mxu0 0.0
    %482 = vmatmul.mubr.f32.gmra.mrb[0].mxu0 %v178
    %v483 = vpop.f32.mrb[0].mxu0
    %v484 = vadd.f32 %v108, %v483
    %v485 = vpop.f32.mrb[0].mxu0
    %486 = vmatprep.mubr.f32.mxu0 0.0
    %487 = vmatmul.mubr.f32.gmra.mrb[0].mxu0 %v181
    %v488 = vpop.f32.mrb[0].mxu0
    %v489 = vadd.f32 %v108, %v488
    %v490 = vpop.f32.mrb[0].mxu0
    %491 = vmatprep.mubr.f32.mxu0 0.0
    %492 = vmatmul.mubr.f32.gmra.mrb[0].mxu0 %v184
    %v493 = vpop.f32.mrb[0].mxu0
    %v494 = vadd.f32 %v108, %v493
    %v495 = vpop.f32.mrb[0].mxu0
    %496 = vmatprep.mubr.f32.mxu0 0.0
    %497 = vmatmul.mubr.f32.gmra.mrb[0].mxu0 %v187
    %v498 = vpop.f32.mrb[0].mxu0
    %v499 = vadd.f32 %v108, %v498
    %v500 = vpop.f32.mrb[0].mxu0
    %501 = vmatprep.mubr.f32.mxu0 0.0
    %502 = vmatmul.mubr.f32.gmra.mrb[0].mxu0 %v190
    %v503 = vpop.f32.mrb[0].mxu0
    %v504 = vadd.f32 %v108, %v503
    %v505 = vpop.f32.mrb[0].mxu0
    %506 = vmatprep.mubr.f32.mxu0 0.0
    %507 = vmatmul.mubr.f32.gmra.mrb[0].mxu0 %v193
    %v508 = vpop.f32.mrb[0].mxu0
    %v509 = vadd.f32 %v108, %v508
    %v510 = vpop.f32.mrb[0].mxu0
    %511 = vmatprep.mubr.f32.mxu0 0.0
    %512 = vmatmul.mubr.f32.gmra.mrb[0].mxu0 %v196
    %v513 = vpop.f32.mrb[0].mxu0
    %v514 = vadd.f32 %v108, %v513
    %v515 = vpop.f32.mrb[0].mxu0
    %516 = vmatprep.mubr.f32.mxu0 0.0
    %517 = vmatmul.mubr.f32.gmra.mrb[0].mxu0 %v199
    %v518 = vpop.f32.mrb[0].mxu0
    %v519 = vadd.f32 %v108, %v518
    %v520 = vpop.f32.mrb[0].mxu0
    %521 = vmatprep.mubr.f32.mxu0 0.0
    %522 = vmatmul.mubr.f32.gmra.mrb[0].mxu0 %v202
    %v523 = vpop.f32.mrb[0].mxu0
    %v524 = vadd.f32 %v108, %v523
    %v525 = vpop.f32.mrb[0].mxu0
    %526 = vmatprep.mubr.f32.mxu0 0.0
    %527 = vmatmul.mubr.f32.gmra.mrb[0].mxu0 %v205
    %v528 = vpop.f32.mrb[0].mxu0
    %v529 = vadd.f32 %v108, %v528
    %v530 = vpop.f32.mrb[0].mxu0
    %531 = vmatprep.mubr.f32.mxu0 0.0
    %532 = vmatmul.mubr.f32.gmra.mrb[0].mxu0 %v208
    %v533 = vpop.f32.mrb[0].mxu0
    %v534 = vadd.f32 %v108, %v533
    %v535 = vpop.f32.mrb[0].mxu0
    %536 = vmatprep.mubr.f32.mxu0 0.0
    %537 = vmatmul.mubr.f32.gmra.mrb[0].mxu0 %v211
    %v538 = vpop.f32.mrb[0].mxu0
    %v539 = vadd.f32 %v108, %v538
    %v540 = vpop.f32.mrb[0].mxu0
    %541 = vmatprep.mubr.f32.mxu0 0.0
    %542 = vmatmul.mubr.f32.gmra.mrb[0].mxu0 %v214
    %v543 = vpop.f32.mrb[0].mxu0
    %v544 = vadd.f32 %v108, %v543
    %v545 = vpop.f32.mrb[0].mxu0
    %546 = vmatprep.mubr.f32.mxu0 0.0
    %547 = vmatmul.mubr.f32.gmra.mrb[0].mxu0 %v217
    %v548 = vpop.f32.mrb[0].mxu0
    %v549 = vadd.f32 %v108, %v548
    %v550 = vpop.f32.mrb[0].mxu0
    %551 = vmatprep.mubr.f32.mxu0 0.0
    %552 = vmatmul.mubr.f32.gmra.mrb[0].mxu0 %v220
    %v553 = vpop.f32.mrb[0].mxu0
    %v554 = vadd.f32 %v108, %v553
    %v555 = vpop.f32.mrb[0].mxu0
    %556 = vmatprep.mubr.f32.mxu0 0.0
    %557 = vmatmul.mubr.f32.gmra.mrb[0].mxu0 %v223
    %v558 = vpop.f32.mrb[0].mxu0
    %v559 = vadd.f32 %v108, %v558
    %v560 = vpop.f32.mrb[0].mxu0
    %561 = vmatprep.mubr.f32.mxu0 0.0
    %562 = vmatmul.mubr.f32.gmra.mrb[0].mxu0 %v226
    %v563 = vpop.f32.mrb[0].mxu0
    %v564 = vadd.f32 %v108, %v563
    %v565 = vpop.f32.mrb[0].mxu0
    %566 = vmatprep.mubr.f32.mxu0 0.0
    %567 = vmatmul.mubr.f32.gmra.mrb[0].mxu0 %v229
    %v568 = vpop.f32.mrb[0].mxu0
    %v569 = vadd.f32 %v108, %v568
    %v570 = vpop.f32.mrb[0].mxu0
    %571 = vmatprep.mubr.f32.mxu0 0.0
    %572 = vmatmul.mubr.f32.gmra.mrb[0].mxu0 %v232
    %v573 = vpop.f32.mrb[0].mxu0
    %v574 = vadd.f32 %v108, %v573
    %v575 = vpop.f32.mrb[0].mxu0
    %576 = vmatprep.mubr.f32.mxu0 0.0
    %577 = vmatmul.mubr.f32.gmra.mrb[0].mxu0 %v235
    %v578 = vpop.f32.mrb[0].mxu0
    %v579 = vadd.f32 %v108, %v578
    %v580 = vpop.f32.mrb[0].mxu0
    %581 = vmatprep.mubr.f32.mxu0 0.0
    %582 = vmatmul.mubr.f32.gmra.mrb[0].mxu0 %v238
    %v583 = vpop.f32.mrb[0].mxu0
    %v584 = vadd.f32 %v108, %v583
    %v585 = vpop.f32.mrb[0].mxu0
    %586 = vmatprep.mubr.f32.mxu0 0.0
    %587 = vmatmul.mubr.f32.gmra.mrb[0].mxu0 %v241
    %v588 = vpop.f32.mrb[0].mxu0
    %v589 = vadd.f32 %v108, %v588
    %v590 = vpop.f32.mrb[0].mxu0
    %591 = vmatprep.mubr.f32.mxu0 0.0
    %592 = vmatmul.mubr.f32.gmra.mrb[0].mxu0 %v244
    %v593 = vpop.f32.mrb[0].mxu0
    %v594 = vadd.f32 %v108, %v593
    %v595 = vpop.f32.mrb[0].mxu0
    %596 = vmatprep.mubr.f32.mxu0 0.0
    %597 = vmatmul.mubr.f32.gmra.mrb[0].mxu0 %v247
    %v598 = vpop.f32.mrb[0].mxu0
    %v599 = vadd.f32 %v108, %v598
    %v600 = vpop.f32.mrb[0].mxu0
    %601 = vmatprep.mubr.f32.mxu0 0.0
    %602 = vmatmul.mubr.f32.gmra.mrb[0].mxu0 %v250
    %v603 = vpop.f32.mrb[0].mxu0
    %v604 = vadd.f32 %v108, %v603
    %v605 = vpop.f32.mrb[0].mxu0
    %606 = vmatprep.mubr.f32.mxu0 0.0
    %607 = vmatmul.mubr.f32.gmra.mrb[0].mxu0 %v253
    %v608 = vpop.f32.mrb[0].mxu0
    %v609 = vadd.f32 %v108, %v608
    %v610 = vpop.f32.mrb[0].mxu0
    %611 = vmatprep.mubr.f32.mxu0 0.0
    %612 = vmatmul.mubr.f32.gmra.mrb[0].mxu0 %v256
    %v613 = vpop.f32.mrb[0].mxu0
    %v614 = vadd.f32 %v108, %v613
    %v615 = vpop.f32.mrb[0].mxu0
    %616 = vmatprep.mubr.f32.mxu0 0.0
    %617 = vmatmul.mubr.f32.gmra.mrb[0].mxu0 %v259
    %v618 = vpop.f32.mrb[0].mxu0
    %v619 = vadd.f32 %v108, %v618
    %v620 = vpop.f32.mrb[0].mxu0
    %621 = vmatprep.mubr.f32.mxu0 0.0
    %622 = vmatmul.mubr.f32.gmra.mrb[0].mxu0 %v262
    %v623 = vpop.f32.mrb[0].mxu0
    %v624 = vadd.f32 %v108, %v623
    %v625 = vpop.f32.mrb[0].mxu0
    %626 = vmatprep.mubr.f32.mxu0 0.0
    %627 = vmatmul.mubr.f32.gmra.mrb[0].mxu0 %v265
    %v628 = vpop.f32.mrb[0].mxu0
    %v629 = vadd.f32 %v108, %v628
    %v630 = vpop.f32.mrb[0].mxu0
    %631 = vmatprep.mubr.f32.mxu0 0.0
    %632 = vmatmul.mubr.f32.gmra.mrb[0].mxu0 %v268
    %v633 = vpop.f32.mrb[0].mxu0
    %v634 = vadd.f32 %v108, %v633
    %v635 = vpop.f32.mrb[0].mxu0
    %636 = vmatprep.mubr.f32.mxu0 0.0
    %637 = vmatmul.mubr.f32.gmra.mrb[0].mxu0 %v271
    %v638 = vpop.f32.mrb[0].mxu0
    %v639 = vadd.f32 %v108, %v638
    %v640 = vpop.f32.mrb[0].mxu0
    %641 = vmatprep.mubr.f32.mxu0 0.0
    %642 = vmatmul.mubr.f32.gmra.mrb[0].mxu0 %v274
    %v643 = vpop.f32.mrb[0].mxu0
    %v644 = vadd.f32 %v108, %v643
    %v645 = vpop.f32.mrb[0].mxu0
    %646 = vmatprep.mubr.f32.mxu0 0.0
    %647 = vmatmul.mubr.f32.gmra.mrb[0].mxu0 %v277
    %v648 = vpop.f32.mrb[0].mxu0
    %v649 = vadd.f32 %v108, %v648
    %v650 = vpop.f32.mrb[0].mxu0
    %651 = vmatprep.mubr.f32.mxu0 0.0
    %652 = vmatmul.mubr.f32.gmra.mrb[0].mxu0 %v280
    %v653 = vpop.f32.mrb[0].mxu0
    %v654 = vadd.f32 %v108, %v653
    %v655 = vpop.f32.mrb[0].mxu0
    %656 = vmatprep.mubr.f32.mxu0 0.0
    %657 = vmatmul.mubr.f32.gmra.mrb[0].mxu0 %v283
    %v658 = vpop.f32.mrb[0].mxu0
    %v659 = vadd.f32 %v108, %v658
    %v660 = vpop.f32.mrb[0].mxu0
    %661 = vmatprep.mubr.f32.mxu0 0.0
    %662 = vmatmul.mubr.f32.gmra.mrb[0].mxu0 %v286
    %v663 = vpop.f32.mrb[0].mxu0
    %v664 = vadd.f32 %v108, %v663
    %v665 = vpop.f32.mrb[0].mxu0
    %666 = vmatprep.mubr.f32.mxu0 0.0
    %667 = vmatmul.mubr.f32.gmra.mrb[0].mxu0 %v289
    %v668 = vpop.f32.mrb[0].mxu0
    %v669 = vadd.f32 %v108, %v668
    %v670 = vpop.f32.mrb[0].mxu0
    %671 = vmatprep.mubr.f32.mxu0 0.0
    %672 = vmatmul.mubr.f32.gmra.mrb[0].mxu0 %v292
    %v673 = vpop.f32.mrb[0].mxu0
    %v674 = vadd.f32 %v108, %v673
    %v675 = vpop.f32.mrb[0].mxu0
    %676 = vmatprep.mubr.f32.mxu0 0.0
    %677 = vmatmul.mubr.f32.gmra.mrb[0].mxu0 %v295
    %v678 = vpop.f32.mrb[0].mxu0
    %v679 = vadd.f32 %v108, %v678
    %v680 = vpop.f32.mrb[0].mxu0
    %681 = vmatprep.mubr.f32.mxu0 0.0
    %682 = vmatmul.mubr.f32.gmra.mrb[0].mxu0 %v298
    %v683 = vpop.f32.mrb[0].mxu0
    %v684 = vadd.f32 %v108, %v683
    %v685 = vpop.f32.mrb[0].mxu0
    %686 = vmatprep.mubr.f32.mxu0 0.0
    %687 = vmatmul.mubr.f32.gmra.mrb[0].mxu0 %v301
    %v688 = vpop.f32.mrb[0].mxu0
    %v689 = vadd.f32 %v108, %v688
    %v690 = vpop.f32.mrb[0].mxu0
    %691 = vdwg.mxu0
    %v692 = vmax.f32 %v374, 0.0
    %v693 = vmax.f32 %v379, 0.0
    %v694 = vmax.f32 %v384, 0.0
    %v695 = vmax.f32 %v389, 0.0
    %v696 = vmax.f32 %v394, 0.0
    %v697 = vmax.f32 %v399, 0.0
    %v698 = vmax.f32 %v404, 0.0
    %v699 = vmax.f32 %v409, 0.0
    %v700 = vmax.f32 %v414, 0.0
    %v701 = vmax.f32 %v419, 0.0
    %v702 = vmax.f32 %v424, 0.0
    %v703 = vmax.f32 %v429, 0.0
    %v704 = vmax.f32 %v434, 0.0
    %v705 = vmax.f32 %v439, 0.0
    %v706 = vmax.f32 %v444, 0.0
    %v707 = vmax.f32 %v449, 0.0
    %v708 = vmax.f32 %v454, 0.0
    %v709 = vmax.f32 %v459, 0.0
    %v710 = vmax.f32 %v464, 0.0
    %v711 = vmax.f32 %v469, 0.0
    %v712 = vmax.f32 %v474, 0.0
    %v713 = vmax.f32 %v479, 0.0
    %v714 = vmax.f32 %v484, 0.0
    %v715 = vmax.f32 %v489, 0.0
    %v716 = vmax.f32 %v494, 0.0
    %v717 = vmax.f32 %v499, 0.0
    %v718 = vmax.f32 %v504, 0.0
    %v719 = vmax.f32 %v509, 0.0
    %v720 = vmax.f32 %v514, 0.0
    %v721 = vmax.f32 %v519, 0.0
    %v722 = vmax.f32 %v524, 0.0
    %v723 = vmax.f32 %v529, 0.0
    %v724 = vmax.f32 %v534, 0.0
    %v725 = vmax.f32 %v539, 0.0
    %v726 = vmax.f32 %v544, 0.0
    %v727 = vmax.f32 %v549, 0.0
    %v728 = vmax.f32 %v554, 0.0
    %v729 = vmax.f32 %v559, 0.0
    %v730 = vmax.f32 %v564, 0.0
    %v731 = vmax.f32 %v569, 0.0
    %v732 = vmax.f32 %v574, 0.0
    %v733 = vmax.f32 %v579, 0.0
    %v734 = vmax.f32 %v584, 0.0
    %v735 = vmax.f32 %v589, 0.0
    %v736 = vmax.f32 %v594, 0.0
    %v737 = vmax.f32 %v599, 0.0
    %v738 = vmax.f32 %v604, 0.0
    %v739 = vmax.f32 %v609, 0.0
    %v740 = vmax.f32 %v614, 0.0
    %v741 = vmax.f32 %v619, 0.0
    %v742 = vmax.f32 %v624, 0.0
    %v743 = vmax.f32 %v629, 0.0
    %v744 = vmax.f32 %v634, 0.0
    %v745 = vmax.f32 %v639, 0.0
    %v746 = vmax.f32 %v644, 0.0
    %v747 = vmax.f32 %v649, 0.0
    %v748 = vmax.f32 %v654, 0.0
    %v749 = vmax.f32 %v659, 0.0
    %v750 = vmax.f32 %v664, 0.0
    %v751 = vmax.f32 %v669, 0.0
    %v752 = vmax.f32 %v674, 0.0
    %v753 = vmax.f32 %v679, 0.0
    %v754 = vmax.f32 %v684, 0.0
    %v755 = vmax.f32 %v689, 0.0
    %v756 = vadd.f32 %v692, %v693
    %v757 = vadd.f32 %v756, %v694
    %v758 = vadd.f32 %v757, %v695
    %v759 = vadd.f32 %v758, %v696
    %v760 = vadd.f32 %v759, %v697
    %v761 = vadd.f32 %v760, %v698
    %v762 = vadd.f32 %v761, %v699
    %v763 = vadd.f32 %v762, %v700
    %v764 = vadd.f32 %v763, %v701
    %v765 = vadd.f32 %v764, %v702
    %v766 = vadd.f32 %v765, %v703
    %v767 = vadd.f32 %v766, %v704
    %v768 = vadd.f32 %v767, %v705
    %v769 = vadd.f32 %v768, %v706
    %v770 = vadd.f32 %v769, %v707
    %v771 = vadd.f32 %v770, %v708
    %v772 = vadd.f32 %v771, %v709
    %v773 = vadd.f32 %v772, %v710
    %v774 = vadd.f32 %v773, %v711
    %v775 = vadd.f32 %v774, %v712
    %v776 = vadd.f32 %v775, %v713
    %v777 = vadd.f32 %v776, %v714
    %v778 = vadd.f32 %v777, %v715
    %v779 = vadd.f32 %v778, %v716
    %v780 = vadd.f32 %v779, %v717
    %v781 = vadd.f32 %v780, %v718
    %v782 = vadd.f32 %v781, %v719
    %v783 = vadd.f32 %v782, %v720
    %v784 = vadd.f32 %v783, %v721
    %v785 = vadd.f32 %v784, %v722
    %v786 = vadd.f32 %v785, %v723
    %v787 = vrot.slane %v786, 4
    %v788 = vadd.f32 %v786, %v787
    %v789 = vrot.slane %v788, 2
    %v790 = vadd.f32 %v788, %v789
    %v791 = vrot.slane %v790, 1
    %v792 = vadd.f32 %v790, %v791
    %v793 = vadd.f32 %v724, %v725
    %v794 = vadd.f32 %v793, %v726
    %v795 = vadd.f32 %v794, %v727
    %v796 = vadd.f32 %v795, %v728
    %v797 = vadd.f32 %v796, %v729
    %v798 = vadd.f32 %v797, %v730
    %v799 = vadd.f32 %v798, %v731
    %v800 = vadd.f32 %v799, %v732
    %v801 = vadd.f32 %v800, %v733
    %v802 = vadd.f32 %v801, %v734
    %v803 = vadd.f32 %v802, %v735
    %v804 = vadd.f32 %v803, %v736
    %v805 = vadd.f32 %v804, %v737
    %v806 = vadd.f32 %v805, %v738
    %v807 = vadd.f32 %v806, %v739
    %v808 = vadd.f32 %v807, %v740
    %v809 = vadd.f32 %v808, %v741
    %v810 = vadd.f32 %v809, %v742
    %v811 = vadd.f32 %v810, %v743
    %v812 = vadd.f32 %v811, %v744
    %v813 = vadd.f32 %v812, %v745
    %v814 = vadd.f32 %v813, %v746
    %v815 = vadd.f32 %v814, %v747
    %v816 = vadd.f32 %v815, %v748
    %v817 = vadd.f32 %v816, %v749
    %v818 = vadd.f32 %v817, %v750
    %v819 = vadd.f32 %v818, %v751
    %v820 = vadd.f32 %v819, %v752
    %v821 = vadd.f32 %v820, %v753
    %v822 = vadd.f32 %v821, %v754
    %v823 = vadd.f32 %v822, %v755
    %v824 = vrot.slane %v823, 4
    %v825 = vadd.f32 %v823, %v824
    %v826 = vrot.slane %v825, 2
    %v827 = vadd.f32 %v825, %v826
    %v828 = vrot.slane %v827, 1
    %v829 = vadd.f32 %v827, %v828
    %v830 = vmul.f32 %v792, 0.00390625
    %v831 = vmul.f32 %v829, 0.00390625
    %vm834 = vcmask 1041409
    %v835 = vsel %vm834, %v831, %v830
    %837 = vst [vmem:[#allocation2] sm:$0x3] %v835
    %v838 = vld [vmem:[%s4] sm:$0xff]
    %v839 = vld [vmem:[%s4 + $0x8] sm:$0xff]
    %v840 = vld [vmem:[%s4 + $0x10] sm:$0xff]
    %v841 = vld [vmem:[%s4 + $0x18] sm:$0xff]
    %v842 = vld [vmem:[%s4 + $0x20] sm:$0xff]
    %v843 = vld [vmem:[%s4 + $0x28] sm:$0xff]
    %v844 = vld [vmem:[%s4 + $0x30] sm:$0xff]
    %v845 = vld [vmem:[%s4 + $0x38] sm:$0xff]
    %v846 = vld [vmem:[%s4 + $0x40] sm:$0xff]
    %v847 = vld [vmem:[%s4 + $0x48] sm:$0xff]
    %v848 = vld [vmem:[%s4 + $0x50] sm:$0xff]
    %v849 = vld [vmem:[%s4 + $0x58] sm:$0xff]
    %v850 = vld [vmem:[%s4 + $0x60] sm:$0xff]
    %v851 = vld [vmem:[%s4 + $0x68] sm:$0xff]
    %v852 = vld [vmem:[%s4 + $0x70] sm:$0xff]
    %v853 = vld [vmem:[%s4 + $0x78] sm:$0xff]
    %v854 = vld [vmem:[%s6] sm:$0x1]
    %v856 = vlaneseq
    %v857 = vshrl.u32 %v856, 7
    %v858 = vsub.s32 0, %v857
    %v859 = vrot.slane %v854, %v858
    %861 = vmatprep.subr.mxu0 0.0
    %862 = vmatpush1.msra.mxu0 %v838
    %863 = vmatprep.subr.mxu0 0.0
    %864 = vmatpush1.msra.mxu0 %v839
    %865 = vmatprep.subr.mxu0 0.0
    %866 = vmatpush1.msra.mxu0 %v840
    %867 = vmatprep.subr.mxu0 0.0
    %868 = vmatpush1.msra.mxu0 %v841
    %869 = vmatprep.subr.mxu0 0.0
    %870 = vmatpush1.msra.mxu0 %v842
    %871 = vmatprep.subr.mxu0 0.0
    %872 = vmatpush1.msra.mxu0 %v843
    %873 = vmatprep.subr.mxu0 0.0
    %874 = vmatpush1.msra.mxu0 %v844
    %875 = vmatprep.subr.mxu0 0.0
    %876 = vmatpush1.msra.mxu0 %v845
    %877 = vmatprep.subr.mxu0 0.0
    %878 = vmatpush1.msra.mxu0 %v846
    %879 = vmatprep.subr.mxu0 0.0
    %880 = vmatpush1.msra.mxu0 %v847
    %881 = vmatprep.subr.mxu0 0.0
    %882 = vmatpush1.msra.mxu0 %v848
    %883 = vmatprep.subr.mxu0 0.0
    %884 = vmatpush1.msra.mxu0 %v849
    %885 = vmatprep.subr.mxu0 0.0
    %886 = vmatpush1.msra.mxu0 %v850
    %887 = vmatprep.subr.mxu0 0.0
    %888 = vmatpush1.msra.mxu0 %v851
    %889 = vmatprep.subr.mxu0 0.0
    %890 = vmatpush1.msra.mxu0 %v852
    %891 = vmatprep.subr.mxu0 0.0
    %892 = vmatpush1.msra.mxu0 %v853
    %893 = vmatprep.subr.mxu0 0.0
    %894 = vmatpush1.msra.mxu0 0.0
    %895 = vmatprep.subr.mxu0 0.0
    %896 = vmatpush1.msra.mxu0 0.0
    %897 = vmatprep.subr.mxu0 0.0
    %898 = vmatpush1.msra.mxu0 0.0
    %899 = vmatprep.subr.mxu0 0.0
    %900 = vmatpush1.msra.mxu0 0.0
    %901 = vmatprep.subr.mxu0 0.0
    %902 = vmatpush1.msra.mxu0 0.0
    %903 = vmatprep.subr.mxu0 0.0
    %904 = vmatpush1.msra.mxu0 0.0
    %905 = vmatprep.subr.mxu0 0.0
    %906 = vmatpush1.msra.mxu0 0.0
    %907 = vmatprep.subr.mxu0 0.0
    %908 = vmatpush1.msra.mxu0 0.0
    %909 = vmatprep.subr.mxu0 0.0
    %910 = vmatpush1.msra.mxu0 0.0
    %911 = vmatprep.subr.mxu0 0.0
    %912 = vmatpush1.msra.mxu0 0.0
    %913 = vmatprep.subr.mxu0 0.0
    %914 = vmatpush1.msra.mxu0 0.0
    %915 = vmatprep.subr.mxu0 0.0
    %916 = vmatpush1.msra.mxu0 0.0
    %917 = vmatprep.subr.mxu0 0.0
    %918 = vmatpush1.msra.mxu0 0.0
    %919 = vmatprep.subr.mxu0 0.0
    %920 = vmatpush1.msra.mxu0 0.0
    %921 = vmatprep.subr.mxu0 0.0
    %922 = vmatpush1.msra.mxu0 0.0
    %923 = vmatprep.subr.mxu0 0.0
    %924 = vmatpush1.msra.mxu0 0.0
    %925 = vmatprep.mubr.f32.mxu0 0.0
    %926 = vmatmul.mubr.f32.gmra.mrb[0].mxu0 %v835
    %v927 = vpop.f32.mrb[0].mxu0
    %v928 = vadd.f32 %v859, %v927
    %v929 = vpop.f32.mrb[0].mxu0
    %930 = vdwg.mxu0
    %v931 = vld [vmem:[%s5] sm:$0xff]
    %v932 = vld [vmem:[%s5 + $0x8] sm:$0xff]
    %v933 = vld [vmem:[%s5 + $0x10] sm:$0xff]
    %v934 = vld [vmem:[%s5 + $0x18] sm:$0xff]
    %v935 = vld [vmem:[%s5 + $0x20] sm:$0xff]
    %v936 = vld [vmem:[%s5 + $0x28] sm:$0xff]
    %v937 = vld [vmem:[%s5 + $0x30] sm:$0xff]
    %v938 = vld [vmem:[%s5 + $0x38] sm:$0xff]
    %v939 = vld [vmem:[%s5 + $0x40] sm:$0xff]
    %v940 = vld [vmem:[%s5 + $0x48] sm:$0xff]
    %v941 = vld [vmem:[%s5 + $0x50] sm:$0xff]
    %v942 = vld [vmem:[%s5 + $0x58] sm:$0xff]
    %v943 = vld [vmem:[%s5 + $0x60] sm:$0xff]
    %v944 = vld [vmem:[%s5 + $0x68] sm:$0xff]
    %v945 = vld [vmem:[%s5 + $0x70] sm:$0xff]
    %v946 = vld [vmem:[%s5 + $0x78] sm:$0xff]
    %v947 = vld [vmem:[%s7] sm:$0xff]
    %v948 = vld [vmem:[%s7 + $0x8] sm:$0xff]
    %v949 = vld [vmem:[%s7 + $0x10] sm:$0xff]
    %v950 = vld [vmem:[%s7 + $0x18] sm:$0xff]
    %v951 = vld [vmem:[%s7 + $0x20] sm:$0xff]
    %v952 = vld [vmem:[%s7 + $0x28] sm:$0xff]
    %v953 = vld [vmem:[%s7 + $0x30] sm:$0xff]
    %v954 = vld [vmem:[%s7 + $0x38] sm:$0xff]
    %v955 = vld [vmem:[%s7 + $0x40] sm:$0xff]
    %v956 = vld [vmem:[%s7 + $0x48] sm:$0xff]
    %v957 = vld [vmem:[%s7 + $0x50] sm:$0xff]
    %v958 = vld [vmem:[%s7 + $0x58] sm:$0xff]
    %v959 = vld [vmem:[%s7 + $0x60] sm:$0xff]
    %v960 = vld [vmem:[%s7 + $0x68] sm:$0xff]
    %v961 = vld [vmem:[%s7 + $0x70] sm:$0xff]
    %v962 = vld [vmem:[%s7 + $0x78] sm:$0xff]
    %v963 = vld [vmem:[%s8] sm:$0x1]
    %v964 = vld [vmem:[%s3] sm:$0x3]
    %965 = vmatprep.subr.mxu0 0.0
    %966 = vmatpush1.msra.mxu0 %v931
    %967 = vmatprep.subr.mxu0 0.0
    %968 = vmatpush1.msra.mxu0 %v932
    %969 = vmatprep.subr.mxu0 0.0
    %970 = vmatpush1.msra.mxu0 %v933
    %971 = vmatprep.subr.mxu0 0.0
    %972 = vmatpush1.msra.mxu0 %v934
    %973 = vmatprep.subr.mxu0 0.0
    %974 = vmatpush1.msra.mxu0 %v935
    %975 = vmatprep.subr.mxu0 0.0
    %976 = vmatpush1.msra.mxu0 %v936
    %977 = vmatprep.subr.mxu0 0.0
    %978 = vmatpush1.msra.mxu0 %v937
    %979 = vmatprep.subr.mxu0 0.0
    %980 = vmatpush1.msra.mxu0 %v938
    %981 = vmatprep.subr.mxu0 0.0
    %982 = vmatpush1.msra.mxu0 %v939
    %983 = vmatprep.subr.mxu0 0.0
    %984 = vmatpush1.msra.mxu0 %v940
    %985 = vmatprep.subr.mxu0 0.0
    %986 = vmatpush1.msra.mxu0 %v941
    %987 = vmatprep.subr.mxu0 0.0
    %988 = vmatpush1.msra.mxu0 %v942
    %989 = vmatprep.subr.mxu0 0.0
    %990 = vmatpush1.msra.mxu0 %v943
    %991 = vmatprep.subr.mxu0 0.0
    %992 = vmatpush1.msra.mxu0 %v944
    %993 = vmatprep.subr.mxu0 0.0
    %994 = vmatpush1.msra.mxu0 %v945
    %995 = vmatprep.subr.mxu0 0.0
    %996 = vmatpush1.msra.mxu0 %v946
    %997 = vmatprep.subr.mxu0 0.0
    %998 = vmatpush1.msra.mxu0 0.0
    %999 = vmatprep.subr.mxu0 0.0
    %1000 = vmatpush1.msra.mxu0 0.0
    %1001 = vmatprep.subr.mxu0 0.0
    %1002 = vmatpush1.msra.mxu0 0.0
    %1003 = vmatprep.subr.mxu0 0.0
    %1004 = vmatpush1.msra.mxu0 0.0
    %1005 = vmatprep.subr.mxu0 0.0
    %1006 = vmatpush1.msra.mxu0 0.0
    %1007 = vmatprep.subr.mxu0 0.0
    %1008 = vmatpush1.msra.mxu0 0.0
    %1009 = vmatprep.subr.mxu0 0.0
    %1010 = vmatpush1.msra.mxu0 0.0
    %1011 = vmatprep.subr.mxu0 0.0
    %1012 = vmatpush1.msra.mxu0 0.0
    %1013 = vmatprep.subr.mxu0 0.0
    %1014 = vmatpush1.msra.mxu0 0.0
    %1015 = vmatprep.subr.mxu0 0.0
    %1016 = vmatpush1.msra.mxu0 0.0
    %1017 = vmatprep.subr.mxu0 0.0
    %1018 = vmatpush1.msra.mxu0 0.0
    %1019 = vmatprep.subr.mxu0 0.0
    %1020 = vmatpush1.msra.mxu0 0.0
    %1021 = vmatprep.subr.mxu0 0.0
    %1022 = vmatpush1.msra.mxu0 0.0
    %1023 = vmatprep.subr.mxu0 0.0
    %1024 = vmatpush1.msra.mxu0 0.0
    %1025 = vmatprep.subr.mxu0 0.0
    %1026 = vmatpush1.msra.mxu0 0.0
    %1027 = vmatprep.subr.mxu0 0.0
    %1028 = vmatpush1.msra.mxu0 0.0
    %1029 = vmatprep.mubr.f32.mxu0 0.0
    %1030 = vmatmul.mubr.f32.gmra.mrb[0].mxu0 %v964
    %v1031 = vpop.f32.mrb[0].mxu0
    %v1032 = vadd.f32 0.0, %v1031
    %v1033 = vpop.f32.mrb[0].mxu0
    %1034 = vdwg.mxu0
    %v1035 = vadd.f32 %v928, %v1032
    %v1036 = vmax.f32 %v1035, 0.0
    %1037 = vmatprep.subr.mxu0 0.0
    %1038 = vmatpush1.msra.mxu0 %v947
    %1039 = vmatprep.subr.mxu0 0.0
    %1040 = vmatpush1.msra.mxu0 %v948
    %1041 = vmatprep.subr.mxu0 0.0
    %1042 = vmatpush1.msra.mxu0 %v949
    %1043 = vmatprep.subr.mxu0 0.0
    %1044 = vmatpush1.msra.mxu0 %v950
    %1045 = vmatprep.subr.mxu0 0.0
    %1046 = vmatpush1.msra.mxu0 %v951
    %1047 = vmatprep.subr.mxu0 0.0
    %1048 = vmatpush1.msra.mxu0 %v952
    %1049 = vmatprep.subr.mxu0 0.0
    %1050 = vmatpush1.msra.mxu0 %v953
    %1051 = vmatprep.subr.mxu0 0.0
    %1052 = vmatpush1.msra.mxu0 %v954
    %1053 = vmatprep.subr.mxu0 0.0
    %1054 = vmatpush1.msra.mxu0 %v955
    %1055 = vmatprep.subr.mxu0 0.0
    %1056 = vmatpush1.msra.mxu0 %v956
    %1057 = vmatprep.subr.mxu0 0.0
    %1058 = vmatpush1.msra.mxu0 %v957
    %1059 = vmatprep.subr.mxu0 0.0
    %1060 = vmatpush1.msra.mxu0 %v958
    %1061 = vmatprep.subr.mxu0 0.0
    %1062 = vmatpush1.msra.mxu0 %v959
    %1063 = vmatprep.subr.mxu0 0.0
    %1064 = vmatpush1.msra.mxu0 %v960
    %1065 = vmatprep.subr.mxu0 0.0
    %1066 = vmatpush1.msra.mxu0 %v961
    %1067 = vmatprep.subr.mxu0 0.0
    %1068 = vmatpush1.msra.mxu0 %v962
    %1069 = vmatprep.subr.mxu0 0.0
    %1070 = vmatpush1.msra.mxu0 0.0
    %1071 = vmatprep.subr.mxu0 0.0
    %1072 = vmatpush1.msra.mxu0 0.0
    %1073 = vmatprep.subr.mxu0 0.0
    %1074 = vmatpush1.msra.mxu0 0.0
    %1075 = vmatprep.subr.mxu0 0.0
    %1076 = vmatpush1.msra.mxu0 0.0
    %1077 = vmatprep.subr.mxu0 0.0
    %1078 = vmatpush1.msra.mxu0 0.0
    %1079 = vmatprep.subr.mxu0 0.0
    %1080 = vmatpush1.msra.mxu0 0.0
    %1081 = vmatprep.subr.mxu0 0.0
    %1082 = vmatpush1.msra.mxu0 0.0
    %1083 = vmatprep.subr.mxu0 0.0
    %1084 = vmatpush1.msra.mxu0 0.0
    %1085 = vmatprep.subr.mxu0 0.0
    %1086 = vmatpush1.msra.mxu0 0.0
    %1087 = vmatprep.subr.mxu0 0.0
    %1088 = vmatpush1.msra.mxu0 0.0
    %1089 = vmatprep.subr.mxu0 0.0
    %1090 = vmatpush1.msra.mxu0 0.0
    %1091 = vmatprep.subr.mxu0 0.0
    %1092 = vmatpush1.msra.mxu0 0.0
    %1093 = vmatprep.subr.mxu0 0.0
    %1094 = vmatpush1.msra.mxu0 0.0
    %1095 = vmatprep.subr.mxu0 0.0
    %1096 = vmatpush1.msra.mxu0 0.0
    %1097 = vmatprep.subr.mxu0 0.0
    %1098 = vmatpush1.msra.mxu0 0.0
    %1099 = vmatprep.subr.mxu0 0.0
    %1100 = vmatpush1.msra.mxu0 0.0
    %1101 = vmatprep.mubr.f32.mxu0 0.0
    %1102 = vmatmul.mubr.f32.gmra.mrb[0].mxu0 %v1036
    %v1103 = vpop.f32.mrb[0].mxu0
    %v1104 = vadd.f32 0.0, %v1103
    %v1105 = vpop.f32.mrb[0].mxu0
    %1106 = vdwg.mxu0
    %v1107 = vadd.f32 %v964, %v1104
    %v1109 = vlaneseq
    %v1110 = vshrl.u32 %v1109, 7
    %v1111 = vsub.s32 0, %v1110
    %v1112 = vrot.slane %v963, %v1111
    %v1114 = vadd.f32 %v1107, %v1112
    %1115 = vst [vmem:[%s10] sm:$0x3] %v1114
    %1116 = vmatprep.subr.mxu0 0.0
    %1117 = vmatpush1.msra.mxu0 %v931
    %1118 = vmatprep.subr.mxu0 0.0
    %1119 = vmatpush1.msra.mxu0 %v932
    %1120 = vmatprep.subr.mxu0 0.0
    %1121 = vmatpush1.msra.mxu0 %v933
    %1122 = vmatprep.subr.mxu0 0.0
    %1123 = vmatpush1.msra.mxu0 %v934
    %1124 = vmatprep.subr.mxu0 0.0
    %1125 = vmatpush1.msra.mxu0 %v935
    %1126 = vmatprep.subr.mxu0 0.0
    %1127 = vmatpush1.msra.mxu0 %v936
    %1128 = vmatprep.subr.mxu0 0.0
    %1129 = vmatpush1.msra.mxu0 %v937
    %1130 = vmatprep.subr.mxu0 0.0
    %1131 = vmatpush1.msra.mxu0 %v938
    %1132 = vmatprep.subr.mxu0 0.0
    %1133 = vmatpush1.msra.mxu0 %v939
    %1134 = vmatprep.subr.mxu0 0.0
    %1135 = vmatpush1.msra.mxu0 %v940
    %1136 = vmatprep.subr.mxu0 0.0
    %1137 = vmatpush1.msra.mxu0 %v941
    %1138 = vmatprep.subr.mxu0 0.0
    %1139 = vmatpush1.msra.mxu0 %v942
    %1140 = vmatprep.subr.mxu0 0.0
    %1141 = vmatpush1.msra.mxu0 %v943
    %1142 = vmatprep.subr.mxu0 0.0
    %1143 = vmatpush1.msra.mxu0 %v944
    %1144 = vmatprep.subr.mxu0 0.0
    %1145 = vmatpush1.msra.mxu0 %v945
    %1146 = vmatprep.subr.mxu0 0.0
    %1147 = vmatpush1.msra.mxu0 %v946
    %1148 = vmatprep.subr.mxu0 0.0
    %1149 = vmatpush1.msra.mxu0 0.0
    %1150 = vmatprep.subr.mxu0 0.0
    %1151 = vmatpush1.msra.mxu0 0.0
    %1152 = vmatprep.subr.mxu0 0.0
    %1153 = vmatpush1.msra.mxu0 0.0
    %1154 = vmatprep.subr.mxu0 0.0
    %1155 = vmatpush1.msra.mxu0 0.0
    %1156 = vmatprep.subr.mxu0 0.0
    %1157 = vmatpush1.msra.mxu0 0.0
    %1158 = vmatprep.subr.mxu0 0.0
    %1159 = vmatpush1.msra.mxu0 0.0
    %1160 = vmatprep.subr.mxu0 0.0
    %1161 = vmatpush1.msra.mxu0 0.0
    %1162 = vmatprep.subr.mxu0 0.0
    %1163 = vmatpush1.msra.mxu0 0.0
    %1164 = vmatprep.subr.mxu0 0.0
    %1165 = vmatpush1.msra.mxu0 0.0
    %1166 = vmatprep.subr.mxu0 0.0
    %1167 = vmatpush1.msra.mxu0 0.0
    %1168 = vmatprep.subr.mxu0 0.0
    %1169 = vmatpush1.msra.mxu0 0.0
    %1170 = vmatprep.subr.mxu0 0.0
    %1171 = vmatpush1.msra.mxu0 0.0
    %1172 = vmatprep.subr.mxu0 0.0
    %1173 = vmatpush1.msra.mxu0 0.0
    %1174 = vmatprep.subr.mxu0 0.0
    %1175 = vmatpush1.msra.mxu0 0.0
    %1176 = vmatprep.subr.mxu0 0.0
    %1177 = vmatpush1.msra.mxu0 0.0
    %1178 = vmatprep.subr.mxu0 0.0
    %1179 = vmatpush1.msra.mxu0 0.0
    %1180 = vmatprep.mubr.f32.mxu0 0.0
    %1181 = vmatmul.mubr.f32.gmra.mrb[0].mxu0 %v1114
    %v1182 = vpop.f32.mrb[0].mxu0
    %v1183 = vadd.f32 0.0, %v1182
    %v1184 = vpop.f32.mrb[0].mxu0
    %1185 = vdwg.mxu0
    %v1186 = vadd.f32 %v928, %v1183
    %v1187 = vmax.f32 %v1186, 0.0
    %1188 = vmatprep.subr.mxu0 0.0
    %1189 = vmatpush1.msra.mxu0 %v947
    %1190 = vmatprep.subr.mxu0 0.0
    %1191 = vmatpush1.msra.mxu0 %v948
    %1192 = vmatprep.subr.mxu0 0.0
    %1193 = vmatpush1.msra.mxu0 %v949
    %1194 = vmatprep.subr.mxu0 0.0
    %1195 = vmatpush1.msra.mxu0 %v950
    %1196 = vmatprep.subr.mxu0 0.0
    %1197 = vmatpush1.msra.mxu0 %v951
    %1198 = vmatprep.subr.mxu0 0.0
    %1199 = vmatpush1.msra.mxu0 %v952
    %1200 = vmatprep.subr.mxu0 0.0
    %1201 = vmatpush1.msra.mxu0 %v953
    %1202 = vmatprep.subr.mxu0 0.0
    %1203 = vmatpush1.msra.mxu0 %v954
    %1204 = vmatprep.subr.mxu0 0.0
    %1205 = vmatpush1.msra.mxu0 %v955
    %1206 = vmatprep.subr.mxu0 0.0
    %1207 = vmatpush1.msra.mxu0 %v956
    %1208 = vmatprep.subr.mxu0 0.0
    %1209 = vmatpush1.msra.mxu0 %v957
    %1210 = vmatprep.subr.mxu0 0.0
    %1211 = vmatpush1.msra.mxu0 %v958
    %1212 = vmatprep.subr.mxu0 0.0
    %1213 = vmatpush1.msra.mxu0 %v959
    %1214 = vmatprep.subr.mxu0 0.0
    %1215 = vmatpush1.msra.mxu0 %v960
    %1216 = vmatprep.subr.mxu0 0.0
    %1217 = vmatpush1.msra.mxu0 %v961
    %1218 = vmatprep.subr.mxu0 0.0
    %1219 = vmatpush1.msra.mxu0 %v962
    %1220 = vmatprep.subr.mxu0 0.0
    %1221 = vmatpush1.msra.mxu0 0.0
    %1222 = vmatprep.subr.mxu0 0.0
    %1223 = vmatpush1.msra.mxu0 0.0
    %1224 = vmatprep.subr.mxu0 0.0
    %1225 = vmatpush1.msra.mxu0 0.0
    %1226 = vmatprep.subr.mxu0 0.0
    %1227 = vmatpush1.msra.mxu0 0.0
    %1228 = vmatprep.subr.mxu0 0.0
    %1229 = vmatpush1.msra.mxu0 0.0
    %1230 = vmatprep.subr.mxu0 0.0
    %1231 = vmatpush1.msra.mxu0 0.0
    %1232 = vmatprep.subr.mxu0 0.0
    %1233 = vmatpush1.msra.mxu0 0.0
    %1234 = vmatprep.subr.mxu0 0.0
    %1235 = vmatpush1.msra.mxu0 0.0
    %1236 = vmatprep.subr.mxu0 0.0
    %1237 = vmatpush1.msra.mxu0 0.0
    %1238 = vmatprep.subr.mxu0 0.0
    %1239 = vmatpush1.msra.mxu0 0.0
    %1240 = vmatprep.subr.mxu0 0.0
    %1241 = vmatpush1.msra.mxu0 0.0
    %1242 = vmatprep.subr.mxu0 0.0
    %1243 = vmatpush1.msra.mxu0 0.0
    %1244 = vmatprep.subr.mxu0 0.0
    %1245 = vmatpush1.msra.mxu0 0.0
    %1246 = vmatprep.subr.mxu0 0.0
    %1247 = vmatpush1.msra.mxu0 0.0
    %1248 = vmatprep.subr.mxu0 0.0
    %1249 = vmatpush1.msra.mxu0 0.0
    %1250 = vmatprep.subr.mxu0 0.0
    %1251 = vmatpush1.msra.mxu0 0.0
    %1252 = vmatprep.mubr.f32.mxu0 0.0
    %1253 = vmatmul.mubr.f32.gmra.mrb[0].mxu0 %v1187
    %v1254 = vpop.f32.mrb[0].mxu0
    %v1255 = vadd.f32 0.0, %v1254
    %v1256 = vpop.f32.mrb[0].mxu0
    %1257 = vdwg.mxu0
    %v1258 = vadd.f32 %v1114, %v1255
    %v1259 = vadd.f32 %v1258, %v1112
    %s1260 = scalar_lea.vmem %s10, 2
    %1261 = vst [vmem:[%s1260] sm:$0x3] %v1259
    %1262 = vmatprep.subr.mxu0 0.0
    %1263 = vmatpush1.msra.mxu0 %v931
    %1264 = vmatprep.subr.mxu0 0.0
    %1265 = vmatpush1.msra.mxu0 %v932
    %1266 = vmatprep.subr.mxu0 0.0
    %1267 = vmatpush1.msra.mxu0 %v933
    %1268 = vmatprep.subr.mxu0 0.0
    %1269 = vmatpush1.msra.mxu0 %v934
    %1270 = vmatprep.subr.mxu0 0.0
    %1271 = vmatpush1.msra.mxu0 %v935
    %1272 = vmatprep.subr.mxu0 0.0
    %1273 = vmatpush1.msra.mxu0 %v936
    %1274 = vmatprep.subr.mxu0 0.0
    %1275 = vmatpush1.msra.mxu0 %v937
    %1276 = vmatprep.subr.mxu0 0.0
    %1277 = vmatpush1.msra.mxu0 %v938
    %1278 = vmatprep.subr.mxu0 0.0
    %1279 = vmatpush1.msra.mxu0 %v939
    %1280 = vmatprep.subr.mxu0 0.0
    %1281 = vmatpush1.msra.mxu0 %v940
    %1282 = vmatprep.subr.mxu0 0.0
    %1283 = vmatpush1.msra.mxu0 %v941
    %1284 = vmatprep.subr.mxu0 0.0
    %1285 = vmatpush1.msra.mxu0 %v942
    %1286 = vmatprep.subr.mxu0 0.0
    %1287 = vmatpush1.msra.mxu0 %v943
    %1288 = vmatprep.subr.mxu0 0.0
    %1289 = vmatpush1.msra.mxu0 %v944
    %1290 = vmatprep.subr.mxu0 0.0
    %1291 = vmatpush1.msra.mxu0 %v945
    %1292 = vmatprep.subr.mxu0 0.0
    %1293 = vmatpush1.msra.mxu0 %v946
    %1294 = vmatprep.subr.mxu0 0.0
    %1295 = vmatpush1.msra.mxu0 0.0
    %1296 = vmatprep.subr.mxu0 0.0
    %1297 = vmatpush1.msra.mxu0 0.0
    %1298 = vmatprep.subr.mxu0 0.0
    %1299 = vmatpush1.msra.mxu0 0.0
    %1300 = vmatprep.subr.mxu0 0.0
    %1301 = vmatpush1.msra.mxu0 0.0
    %1302 = vmatprep.subr.mxu0 0.0
    %1303 = vmatpush1.msra.mxu0 0.0
    %1304 = vmatprep.subr.mxu0 0.0
    %1305 = vmatpush1.msra.mxu0 0.0
    %1306 = vmatprep.subr.mxu0 0.0
    %1307 = vmatpush1.msra.mxu0 0.0
    %1308 = vmatprep.subr.mxu0 0.0
    %1309 = vmatpush1.msra.mxu0 0.0
    %1310 = vmatprep.subr.mxu0 0.0
    %1311 = vmatpush1.msra.mxu0 0.0
    %1312 = vmatprep.subr.mxu0 0.0
    %1313 = vmatpush1.msra.mxu0 0.0
    %1314 = vmatprep.subr.mxu0 0.0
    %1315 = vmatpush1.msra.mxu0 0.0
    %1316 = vmatprep.subr.mxu0 0.0
    %1317 = vmatpush1.msra.mxu0 0.0
    %1318 = vmatprep.subr.mxu0 0.0
    %1319 = vmatpush1.msra.mxu0 0.0
    %1320 = vmatprep.subr.mxu0 0.0
    %1321 = vmatpush1.msra.mxu0 0.0
    %1322 = vmatprep.subr.mxu0 0.0
    %1323 = vmatpush1.msra.mxu0 0.0
    %1324 = vmatprep.subr.mxu0 0.0
    %1325 = vmatpush1.msra.mxu0 0.0
    %1326 = vmatprep.mubr.f32.mxu0 0.0
    %1327 = vmatmul.mubr.f32.gmra.mrb[0].mxu0 %v1259
    %v1328 = vpop.f32.mrb[0].mxu0
    %v1329 = vadd.f32 0.0, %v1328
    %v1330 = vpop.f32.mrb[0].mxu0
    %1331 = vdwg.mxu0
    %v1332 = vadd.f32 %v928, %v1329
    %v1333 = vmax.f32 %v1332, 0.0
    %1334 = vmatprep.subr.mxu0 0.0
    %1335 = vmatpush1.msra.mxu0 %v947
    %1336 = vmatprep.subr.mxu0 0.0
    %1337 = vmatpush1.msra.mxu0 %v948
    %1338 = vmatprep.subr.mxu0 0.0
    %1339 = vmatpush1.msra.mxu0 %v949
    %1340 = vmatprep.subr.mxu0 0.0
    %1341 = vmatpush1.msra.mxu0 %v950
    %1342 = vmatprep.subr.mxu0 0.0
    %1343 = vmatpush1.msra.mxu0 %v951
    %1344 = vmatprep.subr.mxu0 0.0
    %1345 = vmatpush1.msra.mxu0 %v952
    %1346 = vmatprep.subr.mxu0 0.0
    %1347 = vmatpush1.msra.mxu0 %v953
    %1348 = vmatprep.subr.mxu0 0.0
    %1349 = vmatpush1.msra.mxu0 %v954
    %1350 = vmatprep.subr.mxu0 0.0
    %1351 = vmatpush1.msra.mxu0 %v955
    %1352 = vmatprep.subr.mxu0 0.0
    %1353 = vmatpush1.msra.mxu0 %v956
    %1354 = vmatprep.subr.mxu0 0.0
    %1355 = vmatpush1.msra.mxu0 %v957
    %1356 = vmatprep.subr.mxu0 0.0
    %1357 = vmatpush1.msra.mxu0 %v958
    %1358 = vmatprep.subr.mxu0 0.0
    %1359 = vmatpush1.msra.mxu0 %v959
    %1360 = vmatprep.subr.mxu0 0.0
    %1361 = vmatpush1.msra.mxu0 %v960
    %1362 = vmatprep.subr.mxu0 0.0
    %1363 = vmatpush1.msra.mxu0 %v961
    %1364 = vmatprep.subr.mxu0 0.0
    %1365 = vmatpush1.msra.mxu0 %v962
    %1366 = vmatprep.subr.mxu0 0.0
    %1367 = vmatpush1.msra.mxu0 0.0
    %1368 = vmatprep.subr.mxu0 0.0
    %1369 = vmatpush1.msra.mxu0 0.0
    %1370 = vmatprep.subr.mxu0 0.0
    %1371 = vmatpush1.msra.mxu0 0.0
    %1372 = vmatprep.subr.mxu0 0.0
    %1373 = vmatpush1.msra.mxu0 0.0
    %1374 = vmatprep.subr.mxu0 0.0
    %1375 = vmatpush1.msra.mxu0 0.0
    %1376 = vmatprep.subr.mxu0 0.0
    %1377 = vmatpush1.msra.mxu0 0.0
    %1378 = vmatprep.subr.mxu0 0.0
    %1379 = vmatpush1.msra.mxu0 0.0
    %1380 = vmatprep.subr.mxu0 0.0
    %1381 = vmatpush1.msra.mxu0 0.0
    %1382 = vmatprep.subr.mxu0 0.0
    %1383 = vmatpush1.msra.mxu0 0.0
    %1384 = vmatprep.subr.mxu0 0.0
    %1385 = vmatpush1.msra.mxu0 0.0
    %1386 = vmatprep.subr.mxu0 0.0
    %1387 = vmatpush1.msra.mxu0 0.0
    %1388 = vmatprep.subr.mxu0 0.0
    %1389 = vmatpush1.msra.mxu0 0.0
    %1390 = vmatprep.subr.mxu0 0.0
    %1391 = vmatpush1.msra.mxu0 0.0
    %1392 = vmatprep.subr.mxu0 0.0
    %1393 = vmatpush1.msra.mxu0 0.0
    %1394 = vmatprep.subr.mxu0 0.0
    %1395 = vmatpush1.msra.mxu0 0.0
    %1396 = vmatprep.subr.mxu0 0.0
    %1397 = vmatpush1.msra.mxu0 0.0
    %1398 = vmatprep.mubr.f32.mxu0 0.0
    %1399 = vmatmul.mubr.f32.gmra.mrb[0].mxu0 %v1333
    %v1400 = vpop.f32.mrb[0].mxu0
    %v1401 = vadd.f32 0.0, %v1400
    %v1402 = vpop.f32.mrb[0].mxu0
    %1403 = vdwg.mxu0
    %v1404 = vadd.f32 %v1259, %v1401
    %v1405 = vadd.f32 %v1404, %v1112
    %s1406 = scalar_lea.vmem %s10, 4
    %1407 = vst [vmem:[%s1406] sm:$0x3] %v1405
    // Predicated region
    $region38: #{_forward_impl.1} parent=1 // pred_check
      _
    $region39: #{_forward_impl.1} parent=1 // pred_check_branch
      %1409 = sbr.rel (0) target = $region41
    $region40: #{_forward_impl.1} parent=1 // pred_region
      %s1411 = ssub.s32 32, 32
      %1412 = vsyncadd [#allocation3], %s1411
      %s1414 = sshll.u32 [#allocation2], 4
      %s1415 = int_to_ptr.vmem [resolvable:$true] %s1414
      %1417 = dma.vmem_to_hbm [thread:$0]  %s1415, 32, %s9, [#allocation3]
    $region41: #{_forward_impl.1} parent=1 // pred_fallthru
      _
    // Predicated region
    $region42: #{_forward_impl.1} parent=1 // pred_check
      _
    $region43: #{_forward_impl.1} parent=1 // pred_check_branch
      %1419 = sbr.rel (0) target = $region45
    $region44: #{_forward_impl.1} parent=1 // pred_region
      _
    $region45: #{_forward_impl.1} parent=1 // pred_fallthru
      _
    // Predicated region
    $region46: #{_forward_impl.1} parent=1 // pred_check
      _
    $region47: #{_forward_impl.1} parent=1 // pred_check_branch
      %1421 = sbr.rel (0) target = $region49
    $region48: #{_forward_impl.1} parent=1 // pred_region
      %1422 = dma.done [#allocation3], 32
    $region49: #{_forward_impl.1} parent=1 // pred_fallthru
      _
    // Predicated region
    $region50: #{_forward_impl.1} parent=1 // pred_check
      _
    $region51: #{_forward_impl.1} parent=1 // pred_check_branch
      %1424 = sbr.rel (0) target = $region53
    $region52: #{_forward_impl.1} parent=1 // pred_region
      _
    $region53: #{_forward_impl.1} parent=1 // pred_fallthru
      _
    %1425 = vsyncpa [#allocation3], 1

</llo_original>
